<compile_context>
chip_gen: v6e
topology: v6e:2x2x1
jax: 0.10.0
libtpu: 0.0.40
codegen_flags: <defaults>
</compile_context>

<pallas_src>
import functools
import math

import jax
import jax.numpy as jnp
from jax.experimental import pallas as pl
from jax.experimental.pallas import tpu as pltpu

F32 = jnp.float32
BF16 = jnp.bfloat16
NEG_INF = -1e9
POSE_DIM = 55 * 3          # 165 (the reference forward hard-codes the (55, 3) view)
POSE_DIM_PAD = 256         # lane-dense carrier for the flat pose between steps

_vmem = functools.partial(pl.BlockSpec, memory_space=pltpu.MemorySpace.VMEM)


def _round_up(x, m):
    return ((x + m - 1) // m) * m


def _get_step_size(step_num, num_steps):
    if step_num < 2:
        return 0.1
    return math.log(step_num) / math.log(num_steps)


# --------------------------------------------------------------- in-kernel ---

def _silu(y):
    # y * sigmoid(y), exact (EUP exp + divide).
    return y / (1.0 + jnp.exp(-y))


def _layer_norm(x, g, b):
    mu = jnp.mean(x, axis=-1, keepdims=True)
    var = jnp.mean((x - mu) ** 2, axis=-1, keepdims=True)
    return (x - mu) * jax.lax.rsqrt(var + 1e-5) * g + b


def _encoder_layer(x, bias, wqkv, wo, w1, w2, vecs, *, nh, hd, hidden, ff):
    """nn.TransformerEncoderLayer (post-norm, relu, eval mode) on a (L, H) block.

    One fused QKV matmul, static lane slices per head, lane-concat of head
    outputs and a single output projection.  Matmul operands are bf16, all
    accumulation and elementwise math is f32.
    """
    scale = 1.0 / math.sqrt(hd)
    b_qkv = vecs[0:1, :3 * hidden]
    b_o = vecs[1:2, :hidden]
    ln1_g = vecs[2:3, :hidden]
    ln1_b = vecs[3:4, :hidden]
    b1 = vecs[4:5, :ff]
    b2 = vecs[5:6, :hidden]
    ln2_g = vecs[6:7, :hidden]
    ln2_b = vecs[7:8, :hidden]

    qkv = jnp.dot(x.astype(BF16), wqkv, preferred_element_type=F32) + b_qkv
    heads = []
    for h in range(nh):
        q = qkv[:, h * hd:(h + 1) * hd]
        k = qkv[:, hidden + h * hd:hidden + (h + 1) * hd]
        v = qkv[:, 2 * hidden + h * hd:2 * hidden + (h + 1) * hd]
        s = jax.lax.dot_general(q.astype(BF16), k.astype(BF16),
                                (((1,), (1,)), ((), ())),
                                preferred_element_type=F32) * scale + bias
        m = jnp.max(s, axis=-1, keepdims=True)
        e = jnp.exp(s - m)
        p = e / jnp.sum(e, axis=-1, keepdims=True)
        heads.append(jnp.dot(p.astype(BF16), v.astype(BF16),
                             preferred_element_type=F32))
    attn = jnp.concatenate(heads, axis=-1) if nh > 1 else heads[0]
    attn = jnp.dot(attn.astype(BF16), wo, preferred_element_type=F32) + b_o
    x = _layer_norm(x + attn, ln1_g, ln1_b)
    h1 = jnp.maximum(
        jnp.dot(x.astype(BF16), w1, preferred_element_type=F32) + b1, 0.0)
    f = jnp.dot(h1.astype(BF16), w2, preferred_element_type=F32) + b2
    return _layer_norm(x + f, ln2_g, ln2_b)


# ----------------------------------------------------------- fused kernels ---

def _text_kernel(emb_ref, bias_ref, wqkv_ref, wo_ref, w1_ref, w2_ref, vecs_ref,
                 seq_head_ref, enc_ref, len_ref, *,
                 nh, hd, hidden, ff, n_layers, t_real):
    """Fused text encoder + scalar seq-length head."""
    x = emb_ref[...]
    bias = bias_ref[...]
    for layer in range(n_layers):
        x = _encoder_layer(x, bias, wqkv_ref[layer], wo_ref[layer],
                           w1_ref[layer], w2_ref[layer], vecs_ref[layer],
                           nh=nh, hd=hd, hidden=hidden, ff=ff)
    enc_ref[...] = x
    # seq_length(encoded).mean(axis=1) == (mean over real tokens of x) @ w + b
    mean_x = jnp.sum(x[0:t_real, :], axis=0, keepdims=True) * (1.0 / t_real)
    w_row = seq_head_ref[0:1, :]
    b = seq_head_ref[1:2, 0:1]
    len_ref[...] = jnp.sum(mean_x * w_row, axis=1, keepdims=True) + b


def _refine_kernel(pose_init_ref, text_ref, pos_ref, bias_ref, stepemb_ref,
                   stepsize_ref, wqkv_ref, wo_ref, w1_ref, w2_ref, vecs_ref,
                   proj_w_ref, mlp_w_ref, misc_b_ref, diff_w2_ref, diff_b2_ref,
                   out_ref, seq_scratch, pose_carry, *,
                   nh, hd, hidden, ff, n_layers, s_len, t_len, l_real):
    """One refinement step per grid iteration; pose carried in VMEM scratch."""
    step = pl.program_id(0)
    lp = seq_scratch.shape[0]

    @pl.when(step == 0)
    def _():
        pose_carry[...] = pose_init_ref[...]
        # pad rows + text rows written once; only pose/step rows change per step
        seq_scratch[...] = jnp.zeros_like(seq_scratch)
        seq_scratch[s_len:s_len + t_len, :] = text_ref[0:t_len, :]

    pose = pose_carry[...]                                   # (S, POSE_DIM_PAD)

    proj_b = misc_b_ref[0:1, :]
    sb1 = misc_b_ref[1:2, :]
    sb2 = misc_b_ref[2:3, :]
    db1 = misc_b_ref[3:4, :]

    # step encoder: Linear -> SiLU -> Linear -> SiLU
    se = stepemb_ref[...]                                    # (1, hidden)
    se = _silu(jnp.dot(se.astype(BF16), mlp_w_ref[0],
                       preferred_element_type=F32) + sb1)
    se = _silu(jnp.dot(se.astype(BF16), mlp_w_ref[1],
                       preferred_element_type=F32) + sb2)

    # embed_pose: projection of the (zero-padded) flat pose + positional embedding
    pe = jnp.dot(pose.astype(BF16), proj_w_ref[...],
                 preferred_element_type=F32) + proj_b + pos_ref[...]

    # per-step rows of the [pose | text | step | pad] sequence
    seq_scratch[0:s_len, :] = pe
    seq_scratch[s_len + t_len:s_len + t_len + 1, :] = se

    seq = seq_scratch[...]
    # torch: (x - x.mean(dim=1)) / x.std(dim=1)  (unbiased, no eps); pad rows
    # stay zero in the scratch so they drop out of the sum; mask them in var.
    rows = jax.lax.broadcasted_iota(jnp.int32, (lp, 1), 0)
    rmask = (rows < l_real).astype(F32)
    mu = jnp.sum(seq, axis=0, keepdims=True) * (1.0 / l_real)
    cen = seq - mu
    var = jnp.sum(rmask * cen * cen, axis=0, keepdims=True) * (1.0 / (l_real - 1))
    seq = cen * jax.lax.rsqrt(var)

    bias = bias_ref[...]
    for layer in range(n_layers):
        seq = _encoder_layer(seq, bias, wqkv_ref[layer], wo_ref[layer],
                             w1_ref[layer], w2_ref[layer], vecs_ref[layer],
                             nh=nh, hd=hd, hidden=hidden, ff=ff)

    # pose_diff_projection on the pose rows only
    x = seq[0:s_len, :]
    d = _silu(jnp.dot(x.astype(BF16), mlp_w_ref[2],
                      preferred_element_type=F32) + db1)
    diff = jnp.dot(d.astype(BF16), diff_w2_ref[...],
                   preferred_element_type=F32) + diff_b2_ref[...]

    # blend = True update
    ss = stepsize_ref[...]                                   # (1, 1)
    new_pose = (1.0 - ss) * pose + ss * diff
    pose_carry[...] = new_pose
    out_ref[...] = new_pose


# ----------------------------------------------------------- params / pack ---

def init_params(key, *, vocab, hidden, ff, text_depth, pose_depth,
                pose_dim, num_steps, max_seq):
    keys = iter(jax.random.split(key, 256))

    def nrm(shape, scale=0.05):
        return (scale * jax.random.normal(next(keys), shape)).astype(F32)

    def enc_layer():
        return dict(
            w_qkv=nrm((hidden, 3 * hidden)), b_qkv=jnp.zeros((3 * hidden,), F32),
            w_o=nrm((hidden, hidden)), b_o=jnp.zeros((hidden,), F32),
            ln1_g=jnp.ones((hidden,), F32), ln1_b=jnp.zeros((hidden,), F32),
            w1=nrm((hidden, ff)), b1=jnp.zeros((ff,), F32),
            w2=nrm((ff, hidden)), b2=jnp.zeros((hidden,), F32),
            ln2_g=jnp.ones((hidden,), F32), ln2_b=jnp.zeros((hidden,), F32),
        )

    embedding = nrm((vocab, hidden), 1.0)
    embedding = embedding.at[0].set(0.0)  # padding_idx = 0

    return dict(
        embedding=embedding,
        step_embedding=nrm((num_steps, hidden), 1.0),
        positional=nrm((max_seq, hidden), 1.0),
        alpha_text=nrm((), 1.0),
        alpha_pose=nrm((), 1.0),
        pose_proj_w=nrm((pose_dim, hidden)), pose_proj_b=jnp.zeros((hidden,), F32),
        text_layers=[enc_layer() for _ in range(text_depth)],
        pose_layers=[enc_layer() for _ in range(pose_depth)],
        step_w1=nrm((hidden, hidden)), step_b1=jnp.zeros((hidden,), F32),
        step_w2=nrm((hidden, hidden)), step_b2=jnp.zeros((hidden,), F32),
        seq_w=nrm((hidden, 1)), seq_b=jnp.zeros((1,), F32),
        diff_w1=nrm((hidden, hidden)), diff_b1=jnp.zeros((hidden,), F32),
        diff_w2=nrm((hidden, pose_dim)), diff_b2=jnp.zeros((pose_dim,), F32),
    )


def _pack_layer_stack(layers, hidden, ff):
    """Stack per-layer weights (bf16) and pack all small vectors into one array."""
    vw = _round_up(max(3 * hidden, ff, hidden), 128)
    wqkv, wo, w1, w2, vecs = [], [], [], [], []
    for p in layers:
        wqkv.append(p["w_qkv"])
        wo.append(p["w_o"])
        w1.append(p["w1"])
        w2.append(p["w2"])
        v = jnp.zeros((8, vw), F32)
        v = v.at[0, :3 * hidden].set(p["b_qkv"])
        v = v.at[1, :hidden].set(p["b_o"])
        v = v.at[2, :hidden].set(p["ln1_g"])
        v = v.at[3, :hidden].set(p["ln1_b"])
        v = v.at[4, :ff].set(p["b1"])
        v = v.at[5, :hidden].set(p["b2"])
        v = v.at[6, :hidden].set(p["ln2_g"])
        v = v.at[7, :hidden].set(p["ln2_b"])
        vecs.append(v)
    return dict(
        wqkv=jnp.stack(wqkv).astype(BF16),
        wo=jnp.stack(wo).astype(BF16),
        w1=jnp.stack(w1).astype(BF16),
        w2=jnp.stack(w2).astype(BF16),
        vecs=jnp.stack(vecs).astype(F32),
    )


def pack_params(params, cfg):
    hidden = cfg["hidden_dim"]
    ff = cfg["ff"]

    pose_proj_w = jnp.zeros((POSE_DIM_PAD, hidden), F32).at[:POSE_DIM].set(
        params["pose_proj_w"]).astype(BF16)
    diff_w2 = jnp.zeros((hidden, POSE_DIM_PAD), F32).at[:, :POSE_DIM].set(
        params["diff_w2"]).astype(BF16)
    diff_b2 = jnp.zeros((1, POSE_DIM_PAD), F32).at[0, :POSE_DIM].set(
        params["diff_b2"])

    mlp_w = jnp.stack([params["step_w1"], params["step_w2"],
                       params["diff_w1"]]).astype(BF16)
    misc_b = jnp.zeros((8, hidden), F32)
    misc_b = misc_b.at[0].set(params["pose_proj_b"])
    misc_b = misc_b.at[1].set(params["step_b1"])
    misc_b = misc_b.at[2].set(params["step_b2"])
    misc_b = misc_b.at[3].set(params["diff_b1"])

    seq_head = jnp.zeros((2, hidden), F32)
    seq_head = seq_head.at[0].set(params["seq_w"][:, 0])
    seq_head = seq_head.at[1, 0].set(params["seq_b"][0])

    return dict(
        embedding=params["embedding"],
        step_embedding=params["step_embedding"],
        positional=params["positional"],
        alpha_text=params["alpha_text"],
        alpha_pose=params["alpha_pose"],
        text=_pack_layer_stack(params["text_layers"], hidden, ff),
        pose=_pack_layer_stack(params["pose_layers"], hidden, ff),
        pose_proj_w=pose_proj_w,
        mlp_w=mlp_w, misc_b=misc_b,
        diff_w2=diff_w2, diff_b2=diff_b2,
        seq_head=seq_head,
    )


# ----------------------------------------------------------------- model ----

def build_model(cfg):
    hidden = cfg["hidden_dim"]
    nh = cfg["heads"]
    hd = hidden // nh
    ff = cfg["ff"]
    num_steps = cfg["num_steps"]
    text_depth = cfg["text_depth"]
    pose_depth = cfg["pose_depth"]

    def call_text_encoder(packed, emb_p, bias, t, tp):
        tx = packed["text"]
        args = [emb_p, bias, tx["wqkv"], tx["wo"], tx["w1"], tx["w2"],
                tx["vecs"], packed["seq_head"]]
        return pl.pallas_call(
            functools.partial(_text_kernel, nh=nh, hd=hd, hidden=hidden, ff=ff,
                              n_layers=text_depth, t_real=t),
            out_shape=(jax.ShapeDtypeStruct((tp, hidden), F32),
                       jax.ShapeDtypeStruct((1, 1), F32)),
            in_specs=[_vmem()] * len(args),
            out_specs=(_vmem(), _vmem()),
        )(*args)

    def call_refine(packed, pose_init, text_enc, pose_pos, key_bias, step_emb,
                    step_size, s, t, l, lp, tp):
        po = packed["pose"]
        args = [pose_init, text_enc, pose_pos, key_bias, step_emb, step_size,
                po["wqkv"], po["wo"], po["w1"], po["w2"], po["vecs"],
                packed["pose_proj_w"], packed["mlp_w"], packed["misc_b"],
                packed["diff_w2"], packed["diff_b2"]]
        const2 = lambda i: (0, 0)
        const3 = lambda i: (0, 0, 0)
        in_specs = [
            pl.BlockSpec((s, POSE_DIM_PAD), const2),                  # pose init
            pl.BlockSpec((tp, hidden), const2),                       # text encoding
            pl.BlockSpec((s, hidden), const2),                        # pose positional
            pl.BlockSpec((None, 1, lp), lambda i: (i, 0, 0)),         # per-step key bias
            pl.BlockSpec((None, 1, hidden), lambda i: (i, 0, 0)),     # per-step step emb
            pl.BlockSpec((None, 1, 1), lambda i: (i, 0, 0)),          # per-step step size
            pl.BlockSpec(po["wqkv"].shape, const3),
            pl.BlockSpec(po["wo"].shape, const3),
            pl.BlockSpec(po["w1"].shape, const3),
            pl.BlockSpec(po["w2"].shape, const3),
            pl.BlockSpec(po["vecs"].shape, const3),
            pl.BlockSpec((POSE_DIM_PAD, hidden), const2),
            pl.BlockSpec((3, hidden, hidden), const3),
            pl.BlockSpec((8, hidden), const2),
            pl.BlockSpec((hidden, POSE_DIM_PAD), const2),
            pl.BlockSpec((1, POSE_DIM_PAD), const2),
        ]
        # TODO(synk): for batched serving on v7x add a leading batch grid axis
        # marked "parallel" so the two TensorCores are both used.
        return pl.pallas_call(
            functools.partial(_refine_kernel, nh=nh, hd=hd, hidden=hidden,
                              ff=ff, n_layers=pose_depth,
                              s_len=s, t_len=t, l_real=l),
            grid=(num_steps,),
            out_shape=jax.ShapeDtypeStruct((s, POSE_DIM_PAD), F32),
            in_specs=in_specs,
            out_specs=pl.BlockSpec((s, POSE_DIM_PAD), const2),
            scratch_shapes=[pltpu.VMEM((lp, hidden), F32),
                            pltpu.VMEM((s, POSE_DIM_PAD), F32)],
            compiler_params=pltpu.CompilerParams(
                dimension_semantics=("arbitrary",)),
        )(*args)

    def _encode_text_impl(packed, token_ids, attention_mask):
        t = token_ids.shape[0]
        tp = _round_up(t, 8)
        emb = packed["embedding"][token_ids] + \
            packed["alpha_text"] * packed["positional"][:t]
        emb_p = jnp.pad(emb.astype(F32), ((0, tp - t), (0, 0)))
        ignore = jnp.logical_not(attention_mask.astype(bool))
        ignore = jnp.pad(ignore, (0, tp - t), constant_values=True)
        bias = jnp.where(ignore, NEG_INF, 0.0).astype(F32).reshape(1, tp)
        return call_text_encoder(packed, emb_p, bias, t, tp)

    encode_text = jax.jit(_encode_text_impl)

    def _refine_impl(packed, text_enc, attention_mask, first_pose, s):
        t = attention_mask.shape[0]
        tp = text_enc.shape[0]
        l = s + t + 1
        lp = _round_up(l, 8)

        pose_pos = (packed["alpha_pose"] * packed["positional"][:s]).astype(F32)
        pose_flat = jnp.broadcast_to(
            first_pose.reshape(1, POSE_DIM).astype(F32), (s, POSE_DIM))
        pose_init = jnp.pad(pose_flat, ((0, 0), (0, POSE_DIM_PAD - POSE_DIM)))

        # text_encoding['mask'] is flipped in place inside every encode_pose
        # call in the reference implementation; reproduce that exactly.
        text_mask = attention_mask.astype(bool)
        biases = []
        for _ in range(num_steps):
            text_mask = jnp.logical_not(text_mask)
            ignore = jnp.concatenate([
                jnp.zeros((s,), jnp.bool_),            # pose frames
                text_mask,                             # text tokens (flipped)
                jnp.zeros((1,), jnp.bool_),            # step token
                jnp.ones((lp - l,), jnp.bool_),        # sublane pad rows
            ])
            biases.append(jnp.where(ignore, NEG_INF, 0.0).astype(F32))
        key_bias = jnp.stack(biases).reshape(num_steps, 1, lp)

        step_emb = packed["step_embedding"][:num_steps].astype(F32)
        step_emb = step_emb.reshape(num_steps, 1, hidden)

        sizes = []
        for step in range(num_steps):
            cur = _get_step_size(step + 1, num_steps)
            prev = _get_step_size(step, num_steps) if step > 0 else 0.0
            sizes.append(cur - prev)
        step_size = jnp.asarray(sizes, F32).reshape(num_steps, 1, 1)

        pose_p = call_refine(packed, pose_init, text_enc, pose_pos, key_bias,
                             step_emb, step_size, s, t, l, lp, tp)
        pose = pose_p[:, :POSE_DIM].reshape(s, 55, 3)
        return pose[None]                              # (1, S, 55, 3)

    refine = jax.jit(_refine_impl, static_argnames=("s",))

    def forward(packed, token_ids, attention_mask, first_pose, sequence_length=-1):
        text_enc, len_pred = encode_text(packed, token_ids, attention_mask)
        if sequence_length == -1:
            # predicted length determines static shapes -> host sync only here
            seq_len = float(len_pred[0, 0]) + 100.0
            s = max(min(int(round(seq_len)), cfg["max_seq_size"]),
                    cfg["min_seq_size"])
        else:
            s = int(sequence_length)
        # TODO(synk): num_steps == 1 path (single unblended refine) not wired up.
        return refine(packed, text_enc, attention_mask, first_pose, s=s)

    return forward


# ------------------------------------------------------------------ main ----

if __name__ == "__main__":
    cfg = dict(hidden_dim=32, heads=2, ff=64, text_depth=2, pose_depth=4,
               num_steps=3, max_seq_size=64, min_seq_size=8, vocab=64)

    key = jax.random.PRNGKey(0)
    pkey, dkey = jax.random.split(key)
    raw_params = init_params(pkey, vocab=cfg["vocab"], hidden=cfg["hidden_dim"],
                             ff=cfg["ff"], text_depth=cfg["text_depth"],
                             pose_depth=cfg["pose_depth"], pose_dim=POSE_DIM,
                             num_steps=cfg["num_steps"],
                             max_seq=cfg["max_seq_size"])
    packed = pack_params(raw_params, cfg)
    forward = build_model(cfg)

    # TODO(synk): real HF tokenizer not available; deterministic char tokenizer.
    text = "a person waves hello"
    ids = [(ord(c) % (cfg["vocab"] - 1)) + 1 for c in text][:8]
    token_ids = jnp.array(ids, dtype=jnp.int32)                    # (T=8,)
    attention_mask = jnp.ones((token_ids.shape[0],), dtype=jnp.int32)
    first_pose = jax.random.normal(dkey, (55, 3), dtype=F32)       # (55, 3)

    out = forward(packed, token_ids, attention_mask, first_pose,
                  sequence_length=16)
    out = jax.block_until_ready(out)
    assert out.shape == (1, 16, 55, 3) and out.dtype == F32
    assert bool(jnp.all(jnp.isfinite(out)))
    print("KERNEL_OK")
</pallas_src>

<mosaic_0001>
module attributes {stable_mosaic.version = 11 : i64} {
  func.func @_text_kernel(%arg0: memref<8x32xf32, #tpu.memory_space<vmem>>, %arg1: memref<1x8xf32, #tpu.memory_space<vmem>>, %arg2: memref<2x32x96xbf16, #tpu.memory_space<vmem>>, %arg3: memref<2x32x32xbf16, #tpu.memory_space<vmem>>, %arg4: memref<2x32x64xbf16, #tpu.memory_space<vmem>>, %arg5: memref<2x64x32xbf16, #tpu.memory_space<vmem>>, %arg6: memref<2x8x128xf32, #tpu.memory_space<vmem>>, %arg7: memref<2x32xf32, #tpu.memory_space<vmem>>, %arg8: memref<8x32xf32, #tpu.memory_space<vmem>>, %arg9: memref<1x1xf32, #tpu.memory_space<vmem>>) attributes {dimension_semantics = [], scalar_prefetch = 0 : i64, scratch_operands = 0 : i64, tpu.core_type = #tpu.core_type<tc>} {
    %c0 = arith.constant 0 : index
    %c0_0 = arith.constant 0 : index
    %0 = vector.load %arg0[%c0, %c0_0] : memref<8x32xf32, #tpu.memory_space<vmem>>, vector<8x32xf32>
    %c0_1 = arith.constant 0 : index
    %c0_2 = arith.constant 0 : index
    %1 = vector.load %arg1[%c0_1, %c0_2] : memref<1x8xf32, #tpu.memory_space<vmem>>, vector<1x8xf32>
    %c0_3 = arith.constant 0 : index
    %c0_4 = arith.constant 0 : index
    %c0_5 = arith.constant 0 : index
    %2 = vector.load %arg2[%c0_3, %c0_4, %c0_5] : memref<2x32x96xbf16, #tpu.memory_space<vmem>>, vector<1x32x96xbf16>
    %3 = vector.shape_cast %2 : vector<1x32x96xbf16> to vector<32x96xbf16>
    %c0_6 = arith.constant 0 : index
    %c0_7 = arith.constant 0 : index
    %c0_8 = arith.constant 0 : index
    %4 = vector.load %arg3[%c0_6, %c0_7, %c0_8] : memref<2x32x32xbf16, #tpu.memory_space<vmem>>, vector<1x32x32xbf16>
    %5 = vector.shape_cast %4 : vector<1x32x32xbf16> to vector<32x32xbf16>
    %c0_9 = arith.constant 0 : index
    %c0_10 = arith.constant 0 : index
    %c0_11 = arith.constant 0 : index
    %6 = vector.load %arg4[%c0_9, %c0_10, %c0_11] : memref<2x32x64xbf16, #tpu.memory_space<vmem>>, vector<1x32x64xbf16>
    %7 = vector.shape_cast %6 : vector<1x32x64xbf16> to vector<32x64xbf16>
    %c0_12 = arith.constant 0 : index
    %c0_13 = arith.constant 0 : index
    %c0_14 = arith.constant 0 : index
    %8 = vector.load %arg5[%c0_12, %c0_13, %c0_14] : memref<2x64x32xbf16, #tpu.memory_space<vmem>>, vector<1x64x32xbf16>
    %9 = vector.shape_cast %8 : vector<1x64x32xbf16> to vector<64x32xbf16>
    %c0_15 = arith.constant 0 : index
    %c0_16 = arith.constant 0 : index
    %c0_17 = arith.constant 0 : index
    %10 = vector.load %arg6[%c0_15, %c0_16, %c0_17] : memref<2x8x128xf32, #tpu.memory_space<vmem>>, vector<1x8x128xf32>
    %11 = vector.shape_cast %10 : vector<1x8x128xf32> to vector<8x128xf32>
    %12 = vector.extract_strided_slice %11 {offsets = [0, 0], sizes = [1, 96], strides = [1, 1]} : vector<8x128xf32> to vector<1x96xf32>
    %13 = vector.extract_strided_slice %11 {offsets = [1, 0], sizes = [1, 32], strides = [1, 1]} : vector<8x128xf32> to vector<1x32xf32>
    %14 = vector.extract_strided_slice %11 {offsets = [2, 0], sizes = [1, 32], strides = [1, 1]} : vector<8x128xf32> to vector<1x32xf32>
    %15 = vector.extract_strided_slice %11 {offsets = [3, 0], sizes = [1, 32], strides = [1, 1]} : vector<8x128xf32> to vector<1x32xf32>
    %16 = vector.extract_strided_slice %11 {offsets = [4, 0], sizes = [1, 64], strides = [1, 1]} : vector<8x128xf32> to vector<1x64xf32>
    %17 = vector.extract_strided_slice %11 {offsets = [5, 0], sizes = [1, 32], strides = [1, 1]} : vector<8x128xf32> to vector<1x32xf32>
    %18 = vector.extract_strided_slice %11 {offsets = [6, 0], sizes = [1, 32], strides = [1, 1]} : vector<8x128xf32> to vector<1x32xf32>
    %19 = vector.extract_strided_slice %11 {offsets = [7, 0], sizes = [1, 32], strides = [1, 1]} : vector<8x128xf32> to vector<1x32xf32>
    %20 = arith.truncf %0 : vector<8x32xf32> to vector<8x32xbf16>
    %cst = arith.constant dense<0.000000e+00> : vector<8x96xf32>
    %21 = tpu.matmul %20, %3, %cst {dimension_numbers = #tpu.dot_dimension_numbers<[1], [0], [0], [1], [0, 0, 1, 1], [], []>} : vector<8x32xbf16>, vector<32x96xbf16>, vector<8x96xf32> -> vector<8x96xf32>
    %22 = vector.broadcast %12 : vector<1x96xf32> to vector<8x96xf32>
    %23 = arith.addf %21, %22 : vector<8x96xf32>
    %24 = vector.extract_strided_slice %23 {offsets = [0, 0], sizes = [8, 16], strides = [1, 1]} : vector<8x96xf32> to vector<8x16xf32>
    %25 = vector.extract_strided_slice %23 {offsets = [0, 32], sizes = [8, 16], strides = [1, 1]} : vector<8x96xf32> to vector<8x16xf32>
    %26 = vector.extract_strided_slice %23 {offsets = [0, 64], sizes = [8, 16], strides = [1, 1]} : vector<8x96xf32> to vector<8x16xf32>
    %27 = arith.truncf %24 : vector<8x16xf32> to vector<8x16xbf16>
    %28 = arith.truncf %25 : vector<8x16xf32> to vector<8x16xbf16>
    %cst_18 = arith.constant dense<0.000000e+00> : vector<8x8xf32>
    %29 = tpu.matmul %27, %28, %cst_18 {dimension_numbers = #tpu.dot_dimension_numbers<[1], [1], [0], [0], [0, 0, 1, 0], [], []>} : vector<8x16xbf16>, vector<8x16xbf16>, vector<8x8xf32> -> vector<8x8xf32>
    %cst_19 = arith.constant 2.500000e-01 : f32
    %30 = vector.broadcast %cst_19 : f32 to vector<8x8xf32>
    %31 = arith.mulf %29, %30 : vector<8x8xf32>
    %32 = vector.broadcast %1 : vector<1x8xf32> to vector<8x8xf32>
    %33 = arith.addf %31, %32 : vector<8x8xf32>
    %cst_20 = arith.constant dense<0xFF800000> : vector<8xf32>
    %34 = vector.multi_reduction <maximumf>, %33, %cst_20 [1] : vector<8x8xf32> to vector<8xf32>
    %35 = vector.shape_cast %34 : vector<8xf32> to vector<8x1xf32>
    %36 = vector.broadcast %35 : vector<8x1xf32> to vector<8x8xf32>
    %37 = arith.subf %33, %36 : vector<8x8xf32>
    %38 = math.exp %37 : vector<8x8xf32>
    %cst_21 = arith.constant dense<0.000000e+00> : vector<8xf32>
    %39 = vector.multi_reduction <add>, %38, %cst_21 [1] : vector<8x8xf32> to vector<8xf32>
    %40 = vector.shape_cast %39 : vector<8xf32> to vector<8x1xf32>
    %41 = vector.broadcast %40 : vector<8x1xf32> to vector<8x8xf32>
    %42 = arith.divf %38, %41 : vector<8x8xf32>
    %43 = arith.truncf %42 : vector<8x8xf32> to vector<8x8xbf16>
    %44 = arith.truncf %26 : vector<8x16xf32> to vector<8x16xbf16>
    %cst_22 = arith.constant dense<0.000000e+00> : vector<8x16xf32>
    %45 = tpu.matmul %43, %44, %cst_22 {dimension_numbers = #tpu.dot_dimension_numbers<[1], [0], [0], [1], [0, 0, 1, 1], [], []>} : vector<8x8xbf16>, vector<8x16xbf16>, vector<8x16xf32> -> vector<8x16xf32>
    %46 = vector.extract_strided_slice %23 {offsets = [0, 16], sizes = [8, 16], strides = [1, 1]} : vector<8x96xf32> to vector<8x16xf32>
    %47 = vector.extract_strided_slice %23 {offsets = [0, 48], sizes = [8, 16], strides = [1, 1]} : vector<8x96xf32> to vector<8x16xf32>
    %48 = vector.extract_strided_slice %23 {offsets = [0, 80], sizes = [8, 16], strides = [1, 1]} : vector<8x96xf32> to vector<8x16xf32>
    %49 = arith.truncf %46 : vector<8x16xf32> to vector<8x16xbf16>
    %50 = arith.truncf %47 : vector<8x16xf32> to vector<8x16xbf16>
    %cst_23 = arith.constant dense<0.000000e+00> : vector<8x8xf32>
    %51 = tpu.matmul %49, %50, %cst_23 {dimension_numbers = #tpu.dot_dimension_numbers<[1], [1], [0], [0], [0, 0, 1, 0], [], []>} : vector<8x16xbf16>, vector<8x16xbf16>, vector<8x8xf32> -> vector<8x8xf32>
    %cst_24 = arith.constant 2.500000e-01 : f32
    %52 = vector.broadcast %cst_24 : f32 to vector<8x8xf32>
    %53 = arith.mulf %51, %52 : vector<8x8xf32>
    %54 = vector.broadcast %1 : vector<1x8xf32> to vector<8x8xf32>
    %55 = arith.addf %53, %54 : vector<8x8xf32>
    %cst_25 = arith.constant dense<0xFF800000> : vector<8xf32>
    %56 = vector.multi_reduction <maximumf>, %55, %cst_25 [1] : vector<8x8xf32> to vector<8xf32>
    %57 = vector.shape_cast %56 : vector<8xf32> to vector<8x1xf32>
    %58 = vector.broadcast %57 : vector<8x1xf32> to vector<8x8xf32>
    %59 = arith.subf %55, %58 : vector<8x8xf32>
    %60 = math.exp %59 : vector<8x8xf32>
    %cst_26 = arith.constant dense<0.000000e+00> : vector<8xf32>
    %61 = vector.multi_reduction <add>, %60, %cst_26 [1] : vector<8x8xf32> to vector<8xf32>
    %62 = vector.shape_cast %61 : vector<8xf32> to vector<8x1xf32>
    %63 = vector.broadcast %62 : vector<8x1xf32> to vector<8x8xf32>
    %64 = arith.divf %60, %63 : vector<8x8xf32>
    %65 = arith.truncf %64 : vector<8x8xf32> to vector<8x8xbf16>
    %66 = arith.truncf %48 : vector<8x16xf32> to vector<8x16xbf16>
    %cst_27 = arith.constant dense<0.000000e+00> : vector<8x16xf32>
    %67 = tpu.matmul %65, %66, %cst_27 {dimension_numbers = #tpu.dot_dimension_numbers<[1], [0], [0], [1], [0, 0, 1, 1], [], []>} : vector<8x8xbf16>, vector<8x16xbf16>, vector<8x16xf32> -> vector<8x16xf32>
    %68 = tpu.concatenate %45, %67 in 1 : vector<8x16xf32>, vector<8x16xf32> -> vector<8x32xf32>
    %69 = arith.truncf %68 : vector<8x32xf32> to vector<8x32xbf16>
    %cst_28 = arith.constant dense<0.000000e+00> : vector<8x32xf32>
    %70 = tpu.matmul %69, %5, %cst_28 {dimension_numbers = #tpu.dot_dimension_numbers<[1], [0], [0], [1], [0, 0, 1, 1], [], []>} : vector<8x32xbf16>, vector<32x32xbf16>, vector<8x32xf32> -> vector<8x32xf32>
    %71 = vector.broadcast %13 : vector<1x32xf32> to vector<8x32xf32>
    %72 = arith.addf %70, %71 : vector<8x32xf32>
    %73 = arith.addf %0, %72 : vector<8x32xf32>
    %cst_29 = arith.constant dense<0.000000e+00> : vector<8xf32>
    %74 = vector.multi_reduction <add>, %73, %cst_29 [1] : vector<8x32xf32> to vector<8xf32>
    %75 = vector.shape_cast %74 : vector<8xf32> to vector<8x1xf32>
    %cst_30 = arith.constant 3.200000e+01 : f32
    %76 = vector.broadcast %cst_30 : f32 to vector<8x1xf32>
    %77 = arith.divf %75, %76 : vector<8x1xf32>
    %78 = vector.broadcast %77 : vector<8x1xf32> to vector<8x32xf32>
    %79 = arith.subf %73, %78 : vector<8x32xf32>
    %80 = arith.mulf %79, %79 : vector<8x32xf32>
    %cst_31 = arith.constant dense<0.000000e+00> : vector<8xf32>
    %81 = vector.multi_reduction <add>, %80, %cst_31 [1] : vector<8x32xf32> to vector<8xf32>
    %82 = vector.shape_cast %81 : vector<8xf32> to vector<8x1xf32>
    %cst_32 = arith.constant 3.200000e+01 : f32
    %83 = vector.broadcast %cst_32 : f32 to vector<8x1xf32>
    %84 = arith.divf %82, %83 : vector<8x1xf32>
    %85 = vector.broadcast %77 : vector<8x1xf32> to vector<8x32xf32>
    %86 = arith.subf %73, %85 : vector<8x32xf32>
    %cst_33 = arith.constant 9.99999974E-6 : f32
    %87 = vector.broadcast %cst_33 : f32 to vector<8x1xf32>
    %88 = arith.addf %84, %87 : vector<8x1xf32>
    %89 = math.rsqrt %88 : vector<8x1xf32>
    %90 = vector.broadcast %89 : vector<8x1xf32> to vector<8x32xf32>
    %91 = arith.mulf %86, %90 : vector<8x32xf32>
    %92 = vector.broadcast %14 : vector<1x32xf32> to vector<8x32xf32>
    %93 = arith.mulf %91, %92 : vector<8x32xf32>
    %94 = vector.broadcast %15 : vector<1x32xf32> to vector<8x32xf32>
    %95 = arith.addf %93, %94 : vector<8x32xf32>
    %96 = arith.truncf %95 : vector<8x32xf32> to vector<8x32xbf16>
    %cst_34 = arith.constant dense<0.000000e+00> : vector<8x64xf32>
    %97 = tpu.matmul %96, %7, %cst_34 {dimension_numbers = #tpu.dot_dimension_numbers<[1], [0], [0], [1], [0, 0, 1, 1], [], []>} : vector<8x32xbf16>, vector<32x64xbf16>, vector<8x64xf32> -> vector<8x64xf32>
    %98 = vector.broadcast %16 : vector<1x64xf32> to vector<8x64xf32>
    %99 = arith.addf %97, %98 : vector<8x64xf32>
    %cst_35 = arith.constant 0.000000e+00 : f32
    %100 = vector.broadcast %cst_35 : f32 to vector<8x64xf32>
    %101 = arith.maximumf %99, %100 : vector<8x64xf32>
    %102 = arith.truncf %101 : vector<8x64xf32> to vector<8x64xbf16>
    %cst_36 = arith.constant dense<0.000000e+00> : vector<8x32xf32>
    %103 = tpu.matmul %102, %9, %cst_36 {dimension_numbers = #tpu.dot_dimension_numbers<[1], [0], [0], [1], [0, 0, 1, 1], [], []>} : vector<8x64xbf16>, vector<64x32xbf16>, vector<8x32xf32> -> vector<8x32xf32>
    %104 = vector.broadcast %17 : vector<1x32xf32> to vector<8x32xf32>
    %105 = arith.addf %103, %104 : vector<8x32xf32>
    %106 = arith.addf %95, %105 : vector<8x32xf32>
    %cst_37 = arith.constant dense<0.000000e+00> : vector<8xf32>
    %107 = vector.multi_reduction <add>, %106, %cst_37 [1] : vector<8x32xf32> to vector<8xf32>
    %108 = vector.shape_cast %107 : vector<8xf32> to vector<8x1xf32>
    %cst_38 = arith.constant 3.200000e+01 : f32
    %109 = vector.broadcast %cst_38 : f32 to vector<8x1xf32>
    %110 = arith.divf %108, %109 : vector<8x1xf32>
    %111 = vector.broadcast %110 : vector<8x1xf32> to vector<8x32xf32>
    %112 = arith.subf %106, %111 : vector<8x32xf32>
    %113 = arith.mulf %112, %112 : vector<8x32xf32>
    %cst_39 = arith.constant dense<0.000000e+00> : vector<8xf32>
    %114 = vector.multi_reduction <add>, %113, %cst_39 [1] : vector<8x32xf32> to vector<8xf32>
    %115 = vector.shape_cast %114 : vector<8xf32> to vector<8x1xf32>
    %cst_40 = arith.constant 3.200000e+01 : f32
    %116 = vector.broadcast %cst_40 : f32 to vector<8x1xf32>
    %117 = arith.divf %115, %116 : vector<8x1xf32>
    %118 = vector.broadcast %110 : vector<8x1xf32> to vector<8x32xf32>
    %119 = arith.subf %106, %118 : vector<8x32xf32>
    %cst_41 = arith.constant 9.99999974E-6 : f32
    %120 = vector.broadcast %cst_41 : f32 to vector<8x1xf32>
    %121 = arith.addf %117, %120 : vector<8x1xf32>
    %122 = math.rsqrt %121 : vector<8x1xf32>
    %123 = vector.broadcast %122 : vector<8x1xf32> to vector<8x32xf32>
    %124 = arith.mulf %119, %123 : vector<8x32xf32>
    %125 = vector.broadcast %18 : vector<1x32xf32> to vector<8x32xf32>
    %126 = arith.mulf %124, %125 : vector<8x32xf32>
    %127 = vector.broadcast %19 : vector<1x32xf32> to vector<8x32xf32>
    %128 = arith.addf %126, %127 : vector<8x32xf32>
    %c1 = arith.constant 1 : index
    %c0_42 = arith.constant 0 : index
    %c0_43 = arith.constant 0 : index
    %129 = vector.load %arg2[%c1, %c0_42, %c0_43] : memref<2x32x96xbf16, #tpu.memory_space<vmem>>, vector<1x32x96xbf16>
    %130 = vector.shape_cast %129 : vector<1x32x96xbf16> to vector<32x96xbf16>
    %c1_44 = arith.constant 1 : index
    %c0_45 = arith.constant 0 : index
    %c0_46 = arith.constant 0 : index
    %131 = vector.load %arg3[%c1_44, %c0_45, %c0_46] : memref<2x32x32xbf16, #tpu.memory_space<vmem>>, vector<1x32x32xbf16>
    %132 = vector.shape_cast %131 : vector<1x32x32xbf16> to vector<32x32xbf16>
    %c1_47 = arith.constant 1 : index
    %c0_48 = arith.constant 0 : index
    %c0_49 = arith.constant 0 : index
    %133 = vector.load %arg4[%c1_47, %c0_48, %c0_49] : memref<2x32x64xbf16, #tpu.memory_space<vmem>>, vector<1x32x64xbf16>
    %134 = vector.shape_cast %133 : vector<1x32x64xbf16> to vector<32x64xbf16>
    %c1_50 = arith.constant 1 : index
    %c0_51 = arith.constant 0 : index
    %c0_52 = arith.constant 0 : index
    %135 = vector.load %arg5[%c1_50, %c0_51, %c0_52] : memref<2x64x32xbf16, #tpu.memory_space<vmem>>, vector<1x64x32xbf16>
    %136 = vector.shape_cast %135 : vector<1x64x32xbf16> to vector<64x32xbf16>
    %c1_53 = arith.constant 1 : index
    %c0_54 = arith.constant 0 : index
    %c0_55 = arith.constant 0 : index
    %137 = vector.load %arg6[%c1_53, %c0_54, %c0_55] : memref<2x8x128xf32, #tpu.memory_space<vmem>>, vector<1x8x128xf32>
    %138 = vector.shape_cast %137 : vector<1x8x128xf32> to vector<8x128xf32>
    %139 = vector.extract_strided_slice %138 {offsets = [0, 0], sizes = [1, 96], strides = [1, 1]} : vector<8x128xf32> to vector<1x96xf32>
    %140 = vector.extract_strided_slice %138 {offsets = [1, 0], sizes = [1, 32], strides = [1, 1]} : vector<8x128xf32> to vector<1x32xf32>
    %141 = vector.extract_strided_slice %138 {offsets = [2, 0], sizes = [1, 32], strides = [1, 1]} : vector<8x128xf32> to vector<1x32xf32>
    %142 = vector.extract_strided_slice %138 {offsets = [3, 0], sizes = [1, 32], strides = [1, 1]} : vector<8x128xf32> to vector<1x32xf32>
    %143 = vector.extract_strided_slice %138 {offsets = [4, 0], sizes = [1, 64], strides = [1, 1]} : vector<8x128xf32> to vector<1x64xf32>
    %144 = vector.extract_strided_slice %138 {offsets = [5, 0], sizes = [1, 32], strides = [1, 1]} : vector<8x128xf32> to vector<1x32xf32>
    %145 = vector.extract_strided_slice %138 {offsets = [6, 0], sizes = [1, 32], strides = [1, 1]} : vector<8x128xf32> to vector<1x32xf32>
    %146 = vector.extract_strided_slice %138 {offsets = [7, 0], sizes = [1, 32], strides = [1, 1]} : vector<8x128xf32> to vector<1x32xf32>
    %147 = arith.truncf %128 : vector<8x32xf32> to vector<8x32xbf16>
    %cst_56 = arith.constant dense<0.000000e+00> : vector<8x96xf32>
    %148 = tpu.matmul %147, %130, %cst_56 {dimension_numbers = #tpu.dot_dimension_numbers<[1], [0], [0], [1], [0, 0, 1, 1], [], []>} : vector<8x32xbf16>, vector<32x96xbf16>, vector<8x96xf32> -> vector<8x96xf32>
    %149 = vector.broadcast %139 : vector<1x96xf32> to vector<8x96xf32>
    %150 = arith.addf %148, %149 : vector<8x96xf32>
    %151 = vector.extract_strided_slice %150 {offsets = [0, 0], sizes = [8, 16], strides = [1, 1]} : vector<8x96xf32> to vector<8x16xf32>
    %152 = vector.extract_strided_slice %150 {offsets = [0, 32], sizes = [8, 16], strides = [1, 1]} : vector<8x96xf32> to vector<8x16xf32>
    %153 = vector.extract_strided_slice %150 {offsets = [0, 64], sizes = [8, 16], strides = [1, 1]} : vector<8x96xf32> to vector<8x16xf32>
    %154 = arith.truncf %151 : vector<8x16xf32> to vector<8x16xbf16>
    %155 = arith.truncf %152 : vector<8x16xf32> to vector<8x16xbf16>
    %cst_57 = arith.constant dense<0.000000e+00> : vector<8x8xf32>
    %156 = tpu.matmul %154, %155, %cst_57 {dimension_numbers = #tpu.dot_dimension_numbers<[1], [1], [0], [0], [0, 0, 1, 0], [], []>} : vector<8x16xbf16>, vector<8x16xbf16>, vector<8x8xf32> -> vector<8x8xf32>
    %cst_58 = arith.constant 2.500000e-01 : f32
    %157 = vector.broadcast %cst_58 : f32 to vector<8x8xf32>
    %158 = arith.mulf %156, %157 : vector<8x8xf32>
    %159 = vector.broadcast %1 : vector<1x8xf32> to vector<8x8xf32>
    %160 = arith.addf %158, %159 : vector<8x8xf32>
    %cst_59 = arith.constant dense<0xFF800000> : vector<8xf32>
    %161 = vector.multi_reduction <maximumf>, %160, %cst_59 [1] : vector<8x8xf32> to vector<8xf32>
    %162 = vector.shape_cast %161 : vector<8xf32> to vector<8x1xf32>
    %163 = vector.broadcast %162 : vector<8x1xf32> to vector<8x8xf32>
    %164 = arith.subf %160, %163 : vector<8x8xf32>
    %165 = math.exp %164 : vector<8x8xf32>
    %cst_60 = arith.constant dense<0.000000e+00> : vector<8xf32>
    %166 = vector.multi_reduction <add>, %165, %cst_60 [1] : vector<8x8xf32> to vector<8xf32>
    %167 = vector.shape_cast %166 : vector<8xf32> to vector<8x1xf32>
    %168 = vector.broadcast %167 : vector<8x1xf32> to vector<8x8xf32>
    %169 = arith.divf %165, %168 : vector<8x8xf32>
    %170 = arith.truncf %169 : vector<8x8xf32> to vector<8x8xbf16>
    %171 = arith.truncf %153 : vector<8x16xf32> to vector<8x16xbf16>
    %cst_61 = arith.constant dense<0.000000e+00> : vector<8x16xf32>
    %172 = tpu.matmul %170, %171, %cst_61 {dimension_numbers = #tpu.dot_dimension_numbers<[1], [0], [0], [1], [0, 0, 1, 1], [], []>} : vector<8x8xbf16>, vector<8x16xbf16>, vector<8x16xf32> -> vector<8x16xf32>
    %173 = vector.extract_strided_slice %150 {offsets = [0, 16], sizes = [8, 16], strides = [1, 1]} : vector<8x96xf32> to vector<8x16xf32>
    %174 = vector.extract_strided_slice %150 {offsets = [0, 48], sizes = [8, 16], strides = [1, 1]} : vector<8x96xf32> to vector<8x16xf32>
    %175 = vector.extract_strided_slice %150 {offsets = [0, 80], sizes = [8, 16], strides = [1, 1]} : vector<8x96xf32> to vector<8x16xf32>
    %176 = arith.truncf %173 : vector<8x16xf32> to vector<8x16xbf16>
    %177 = arith.truncf %174 : vector<8x16xf32> to vector<8x16xbf16>
    %cst_62 = arith.constant dense<0.000000e+00> : vector<8x8xf32>
    %178 = tpu.matmul %176, %177, %cst_62 {dimension_numbers = #tpu.dot_dimension_numbers<[1], [1], [0], [0], [0, 0, 1, 0], [], []>} : vector<8x16xbf16>, vector<8x16xbf16>, vector<8x8xf32> -> vector<8x8xf32>
    %cst_63 = arith.constant 2.500000e-01 : f32
    %179 = vector.broadcast %cst_63 : f32 to vector<8x8xf32>
    %180 = arith.mulf %178, %179 : vector<8x8xf32>
    %181 = vector.broadcast %1 : vector<1x8xf32> to vector<8x8xf32>
    %182 = arith.addf %180, %181 : vector<8x8xf32>
    %cst_64 = arith.constant dense<0xFF800000> : vector<8xf32>
    %183 = vector.multi_reduction <maximumf>, %182, %cst_64 [1] : vector<8x8xf32> to vector<8xf32>
    %184 = vector.shape_cast %183 : vector<8xf32> to vector<8x1xf32>
    %185 = vector.broadcast %184 : vector<8x1xf32> to vector<8x8xf32>
    %186 = arith.subf %182, %185 : vector<8x8xf32>
    %187 = math.exp %186 : vector<8x8xf32>
    %cst_65 = arith.constant dense<0.000000e+00> : vector<8xf32>
    %188 = vector.multi_reduction <add>, %187, %cst_65 [1] : vector<8x8xf32> to vector<8xf32>
    %189 = vector.shape_cast %188 : vector<8xf32> to vector<8x1xf32>
    %190 = vector.broadcast %189 : vector<8x1xf32> to vector<8x8xf32>
    %191 = arith.divf %187, %190 : vector<8x8xf32>
    %192 = arith.truncf %191 : vector<8x8xf32> to vector<8x8xbf16>
    %193 = arith.truncf %175 : vector<8x16xf32> to vector<8x16xbf16>
    %cst_66 = arith.constant dense<0.000000e+00> : vector<8x16xf32>
    %194 = tpu.matmul %192, %193, %cst_66 {dimension_numbers = #tpu.dot_dimension_numbers<[1], [0], [0], [1], [0, 0, 1, 1], [], []>} : vector<8x8xbf16>, vector<8x16xbf16>, vector<8x16xf32> -> vector<8x16xf32>
    %195 = tpu.concatenate %172, %194 in 1 : vector<8x16xf32>, vector<8x16xf32> -> vector<8x32xf32>
    %196 = arith.truncf %195 : vector<8x32xf32> to vector<8x32xbf16>
    %cst_67 = arith.constant dense<0.000000e+00> : vector<8x32xf32>
    %197 = tpu.matmul %196, %132, %cst_67 {dimension_numbers = #tpu.dot_dimension_numbers<[1], [0], [0], [1], [0, 0, 1, 1], [], []>} : vector<8x32xbf16>, vector<32x32xbf16>, vector<8x32xf32> -> vector<8x32xf32>
    %198 = vector.broadcast %140 : vector<1x32xf32> to vector<8x32xf32>
    %199 = arith.addf %197, %198 : vector<8x32xf32>
    %200 = arith.addf %128, %199 : vector<8x32xf32>
    %cst_68 = arith.constant dense<0.000000e+00> : vector<8xf32>
    %201 = vector.multi_reduction <add>, %200, %cst_68 [1] : vector<8x32xf32> to vector<8xf32>
    %202 = vector.shape_cast %201 : vector<8xf32> to vector<8x1xf32>
    %cst_69 = arith.constant 3.200000e+01 : f32
    %203 = vector.broadcast %cst_69 : f32 to vector<8x1xf32>
    %204 = arith.divf %202, %203 : vector<8x1xf32>
    %205 = vector.broadcast %204 : vector<8x1xf32> to vector<8x32xf32>
    %206 = arith.subf %200, %205 : vector<8x32xf32>
    %207 = arith.mulf %206, %206 : vector<8x32xf32>
    %cst_70 = arith.constant dense<0.000000e+00> : vector<8xf32>
    %208 = vector.multi_reduction <add>, %207, %cst_70 [1] : vector<8x32xf32> to vector<8xf32>
    %209 = vector.shape_cast %208 : vector<8xf32> to vector<8x1xf32>
    %cst_71 = arith.constant 3.200000e+01 : f32
    %210 = vector.broadcast %cst_71 : f32 to vector<8x1xf32>
    %211 = arith.divf %209, %210 : vector<8x1xf32>
    %212 = vector.broadcast %204 : vector<8x1xf32> to vector<8x32xf32>
    %213 = arith.subf %200, %212 : vector<8x32xf32>
    %cst_72 = arith.constant 9.99999974E-6 : f32
    %214 = vector.broadcast %cst_72 : f32 to vector<8x1xf32>
    %215 = arith.addf %211, %214 : vector<8x1xf32>
    %216 = math.rsqrt %215 : vector<8x1xf32>
    %217 = vector.broadcast %216 : vector<8x1xf32> to vector<8x32xf32>
    %218 = arith.mulf %213, %217 : vector<8x32xf32>
    %219 = vector.broadcast %141 : vector<1x32xf32> to vector<8x32xf32>
    %220 = arith.mulf %218, %219 : vector<8x32xf32>
    %221 = vector.broadcast %142 : vector<1x32xf32> to vector<8x32xf32>
    %222 = arith.addf %220, %221 : vector<8x32xf32>
    %223 = arith.truncf %222 : vector<8x32xf32> to vector<8x32xbf16>
    %cst_73 = arith.constant dense<0.000000e+00> : vector<8x64xf32>
    %224 = tpu.matmul %223, %134, %cst_73 {dimension_numbers = #tpu.dot_dimension_numbers<[1], [0], [0], [1], [0, 0, 1, 1], [], []>} : vector<8x32xbf16>, vector<32x64xbf16>, vector<8x64xf32> -> vector<8x64xf32>
    %225 = vector.broadcast %143 : vector<1x64xf32> to vector<8x64xf32>
    %226 = arith.addf %224, %225 : vector<8x64xf32>
    %cst_74 = arith.constant 0.000000e+00 : f32
    %227 = vector.broadcast %cst_74 : f32 to vector<8x64xf32>
    %228 = arith.maximumf %226, %227 : vector<8x64xf32>
    %229 = arith.truncf %228 : vector<8x64xf32> to vector<8x64xbf16>
    %cst_75 = arith.constant dense<0.000000e+00> : vector<8x32xf32>
    %230 = tpu.matmul %229, %136, %cst_75 {dimension_numbers = #tpu.dot_dimension_numbers<[1], [0], [0], [1], [0, 0, 1, 1], [], []>} : vector<8x64xbf16>, vector<64x32xbf16>, vector<8x32xf32> -> vector<8x32xf32>
    %231 = vector.broadcast %144 : vector<1x32xf32> to vector<8x32xf32>
    %232 = arith.addf %230, %231 : vector<8x32xf32>
    %233 = arith.addf %222, %232 : vector<8x32xf32>
    %cst_76 = arith.constant dense<0.000000e+00> : vector<8xf32>
    %234 = vector.multi_reduction <add>, %233, %cst_76 [1] : vector<8x32xf32> to vector<8xf32>
    %235 = vector.shape_cast %234 : vector<8xf32> to vector<8x1xf32>
    %cst_77 = arith.constant 3.200000e+01 : f32
    %236 = vector.broadcast %cst_77 : f32 to vector<8x1xf32>
    %237 = arith.divf %235, %236 : vector<8x1xf32>
    %238 = vector.broadcast %237 : vector<8x1xf32> to vector<8x32xf32>
    %239 = arith.subf %233, %238 : vector<8x32xf32>
    %240 = arith.mulf %239, %239 : vector<8x32xf32>
    %cst_78 = arith.constant dense<0.000000e+00> : vector<8xf32>
    %241 = vector.multi_reduction <add>, %240, %cst_78 [1] : vector<8x32xf32> to vector<8xf32>
    %242 = vector.shape_cast %241 : vector<8xf32> to vector<8x1xf32>
    %cst_79 = arith.constant 3.200000e+01 : f32
    %243 = vector.broadcast %cst_79 : f32 to vector<8x1xf32>
    %244 = arith.divf %242, %243 : vector<8x1xf32>
    %245 = vector.broadcast %237 : vector<8x1xf32> to vector<8x32xf32>
    %246 = arith.subf %233, %245 : vector<8x32xf32>
    %cst_80 = arith.constant 9.99999974E-6 : f32
    %247 = vector.broadcast %cst_80 : f32 to vector<8x1xf32>
    %248 = arith.addf %244, %247 : vector<8x1xf32>
    %249 = math.rsqrt %248 : vector<8x1xf32>
    %250 = vector.broadcast %249 : vector<8x1xf32> to vector<8x32xf32>
    %251 = arith.mulf %246, %250 : vector<8x32xf32>
    %252 = vector.broadcast %145 : vector<1x32xf32> to vector<8x32xf32>
    %253 = arith.mulf %251, %252 : vector<8x32xf32>
    %254 = vector.broadcast %146 : vector<1x32xf32> to vector<8x32xf32>
    %255 = arith.addf %253, %254 : vector<8x32xf32>
    %c0_81 = arith.constant 0 : index
    %c0_82 = arith.constant 0 : index
    %256 = vector.load %arg8[%c0_81, %c0_82] : memref<8x32xf32, #tpu.memory_space<vmem>>, vector<8x32xf32>
    tpu.vector_store %arg8[%c0_81, %c0_82], %255 {strides = array<i32>} : memref<8x32xf32, #tpu.memory_space<vmem>>, vector<8x32xf32>,
    %cst_83 = arith.constant dense<0.000000e+00> : vector<32xf32>
    %257 = vector.multi_reduction <add>, %255, %cst_83 [0] : vector<8x32xf32> to vector<32xf32>
    %258 = vector.shape_cast %257 : vector<32xf32> to vector<1x32xf32>
    %cst_84 = arith.constant 1.250000e-01 : f32
    %259 = vector.broadcast %cst_84 : f32 to vector<1x32xf32>
    %260 = arith.mulf %258, %259 : vector<1x32xf32>
    %c0_85 = arith.constant 0 : index
    %c0_86 = arith.constant 0 : index
    %261 = vector.load %arg7[%c0_85, %c0_86] : memref<2x32xf32, #tpu.memory_space<vmem>>, vector<1x32xf32>
    %c1_87 = arith.constant 1 : index
    %c0_88 = arith.constant 0 : index
    %262 = vector.load %arg7[%c1_87, %c0_88] : memref<2x32xf32, #tpu.memory_space<vmem>>, vector<1x1xf32>
    %263 = arith.mulf %260, %261 : vector<1x32xf32>
    %cst_89 = arith.constant dense<0.000000e+00> : vector<1xf32>
    %264 = vector.multi_reduction <add>, %263, %cst_89 [1] : vector<1x32xf32> to vector<1xf32>
    %265 = vector.shape_cast %264 : vector<1xf32> to vector<1x1xf32>
    %266 = arith.addf %265, %262 : vector<1x1xf32>
    %c0_90 = arith.constant 0 : index
    %c0_91 = arith.constant 0 : index
    %267 = vector.load %arg9[%c0_90, %c0_91] : memref<1x1xf32, #tpu.memory_space<vmem>>, vector<1x1xf32>
    tpu.vector_store %arg9[%c0_90, %c0_91], %266 {strides = array<i32>} : memref<1x1xf32, #tpu.memory_space<vmem>>, vector<1x1xf32>,
    return
  }
}

</mosaic_0001>

<llo_original>
// kernel: _encode_text_impl.1
$region0: #{_encode_text_impl.1}
  #allocation0 [shape = 'u32[]', space=smem, size = 0x4, offset = 0x4, fixed_abs, tag = 'smem constant byte address 0x4 - core index']
  #allocation1 [shape = 'u32[144,128]{1,0:T(1,128)}', space=vmem, size = 0x12000, scoped, tag = 'internal scratch']
  %s0 = inlined_call_operand.vmem [shape: f32[8,32], index: 0, kind: input, shape index: {}]
  %s1 = inlined_call_operand.vmem [shape: f32[1,8], index: 1, kind: input, shape index: {}]
  %s2 = inlined_call_operand.vmem [shape: bf16[2,32,96], index: 2, kind: input, shape index: {}]
  %s3 = inlined_call_operand.vmem [shape: bf16[2,32,32], index: 3, kind: input, shape index: {}]
  %s4 = inlined_call_operand.vmem [shape: bf16[2,32,64], index: 4, kind: input, shape index: {}]
  %s5 = inlined_call_operand.vmem [shape: bf16[2,64,32], index: 5, kind: input, shape index: {}]
  %s6 = inlined_call_operand.vmem [shape: f32[2,8,128], index: 6, kind: input, shape index: {}]
  %s7 = inlined_call_operand.vmem [shape: f32[2,32], index: 7, kind: input, shape index: {}]
  %s8 = inlined_call_operand.hbm [shape: f32[8,32], index: 8, kind: output, shape index: {0}]
  %s9 = inlined_call_operand.hbm [shape: f32[1,1], index: 9, kind: output, shape index: {1}]
  %10 = xla_tuple %s8, %s9
  %s11 = sld [smem:[#allocation0]]
  $region50: #{_encode_text_impl.1} parent=0
    _
  %s13 = ssub.s32 1, %s11
  %s14 = scalar_select 0, %s13, %s11
  $region1: #{_encode_text_impl.1} parent=0
    #allocation2 [shape = 'u8[4096]{0}', space=vmem, size = 0x1000, scoped, tag = 'output window, operand 0, single buffered']
    #allocation3 [shape = 's32[1]{0}', space=sflag, size = 0x4, scoped, tag = 'scoped memory for _encode_text_impl.1']
    #allocation4 [shape = 'u8[512]{0}', space=vmem, size = 0x400, scoped, tag = 'output window, operand 1, single buffered']
    #allocation5 [shape = 's32[1]{0}', space=sflag, size = 0x4, scoped, tag = 'scoped memory for _encode_text_impl.1']
    %15 = vsyncpa [#allocation3], 0
    %16 = vsyncpa [#allocation5], 0
    // Predicated region
    $region2: #{_encode_text_impl.1} parent=1 // pred_check
      _
    $region3: #{_encode_text_impl.1} parent=1 // pred_check_branch
      %18 = sbr.rel (0) target = $region5
    $region4: #{_encode_text_impl.1} parent=1 // pred_region
      _
    $region5: #{_encode_text_impl.1} parent=1 // pred_fallthru
      _
    // Predicated region
    $region6: #{_encode_text_impl.1} parent=1 // pred_check
      _
    $region7: #{_encode_text_impl.1} parent=1 // pred_check_branch
      %20 = sbr.rel (0) target = $region9
    $region8: #{_encode_text_impl.1} parent=1 // pred_region
      _
    $region9: #{_encode_text_impl.1} parent=1 // pred_fallthru
      _
    // Predicated region
    $region10: #{_encode_text_impl.1} parent=1 // pred_check
      _
    $region11: #{_encode_text_impl.1} parent=1 // pred_check_branch
      %22 = sbr.rel (0) target = $region13
    $region12: #{_encode_text_impl.1} parent=1 // pred_region
      _
    $region13: #{_encode_text_impl.1} parent=1 // pred_fallthru
      _
    // Predicated region
    $region14: #{_encode_text_impl.1} parent=1 // pred_check
      _
    $region15: #{_encode_text_impl.1} parent=1 // pred_check_branch
      %24 = sbr.rel (0) target = $region17
    $region16: #{_encode_text_impl.1} parent=1 // pred_region
      _
    $region17: #{_encode_text_impl.1} parent=1 // pred_fallthru
      _
    // Predicated region
    $region18: #{_encode_text_impl.1} parent=1 // pred_check
      _
    $region19: #{_encode_text_impl.1} parent=1 // pred_check_branch
      %26 = sbr.rel (0) target = $region21
    $region20: #{_encode_text_impl.1} parent=1 // pred_region
      _
    $region21: #{_encode_text_impl.1} parent=1 // pred_fallthru
      _
    // Predicated region
    $region22: #{_encode_text_impl.1} parent=1 // pred_check
      _
    $region23: #{_encode_text_impl.1} parent=1 // pred_check_branch
      %28 = sbr.rel (0) target = $region25
    $region24: #{_encode_text_impl.1} parent=1 // pred_region
      _
    $region25: #{_encode_text_impl.1} parent=1 // pred_fallthru
      _
    // Predicated region
    $region26: #{_encode_text_impl.1} parent=1 // pred_check
      _
    $region27: #{_encode_text_impl.1} parent=1 // pred_check_branch
      %30 = sbr.rel (0) target = $region29
    $region28: #{_encode_text_impl.1} parent=1 // pred_region
      _
    $region29: #{_encode_text_impl.1} parent=1 // pred_fallthru
      _
    // Predicated region
    $region30: #{_encode_text_impl.1} parent=1 // pred_check
      _
    $region31: #{_encode_text_impl.1} parent=1 // pred_check_branch
      %32 = sbr.rel (0) target = $region33
    $region32: #{_encode_text_impl.1} parent=1 // pred_region
      _
    $region33: #{_encode_text_impl.1} parent=1 // pred_fallthru
      _
    %v34 = vld [vmem:[%s0] sm:$0xff]
    %v35 = vld [vmem:[%s1] sm:$0x1]
    %v36 = vld [vmem:[%s2] sm:$0xf]
    %v37 = vld [vmem:[%s2 + $0x4] sm:$0xf]
    %v38 = vld [vmem:[%s2 + $0x8] sm:$0xf]
    %v39 = vld [vmem:[%s2 + $0xc] sm:$0xf]
    %v40 = vld [vmem:[%s3] sm:$0xf]
    %v41 = vld [vmem:[%s3 + $0x4] sm:$0xf]
    %v42 = vld [vmem:[%s3 + $0x8] sm:$0xf]
    %v43 = vld [vmem:[%s3 + $0xc] sm:$0xf]
    %v44 = vld [vmem:[%s4] sm:$0xf]
    %v45 = vld [vmem:[%s4 + $0x4] sm:$0xf]
    %v46 = vld [vmem:[%s4 + $0x8] sm:$0xf]
    %v47 = vld [vmem:[%s4 + $0xc] sm:$0xf]
    %v48 = vld [vmem:[%s5] sm:$0xf]
    %v49 = vld [vmem:[%s5 + $0x4] sm:$0xf]
    %v50 = vld [vmem:[%s5 + $0x8] sm:$0xf]
    %v51 = vld [vmem:[%s5 + $0xc] sm:$0xf]
    %v52 = vld [vmem:[%s5 + $0x10] sm:$0xf]
    %v53 = vld [vmem:[%s5 + $0x14] sm:$0xf]
    %v54 = vld [vmem:[%s5 + $0x18] sm:$0xf]
    %v55 = vld [vmem:[%s5 + $0x1c] sm:$0xf]
    %v56 = vld [vmem:[%s6] sm:$0xff]
    %v57 = vpack.c.bf16 %v34, %v34
    %v58 = vlaneseq
    %v59 = vshrl.u32 %v58, 7
    %v60 = vsub.s32 0, %v59
    %v61 = vrot.slane %v56, %v60
    %v66 = vunpack.c.l.b16 %v36
    %v67 = vunpack.c.l.b16 %v37
    %v68 = vunpack.c.l.b16 %v38
    %v69 = vunpack.c.l.b16 %v39
    %v70 = vpack.c.b16 %v67, %v66
    %v71 = vpack.c.b16 %v69, %v68
    %vm74 = vcmask 261120
    %v76 = vsel %vm74, %v57, 0
    %78 = vmatprep.subr.bf16.mxu0 0
    %79 = vmatpush1.bf16.msra.mxu0 0
    %80 = vmatprep.subr.bf16.mxu0 0
    %81 = vmatpush1.bf16.msra.mxu0 0
    %82 = vmatprep.subr.bf16.mxu0 0
    %83 = vmatpush1.bf16.msra.mxu0 0
    %84 = vmatprep.subr.bf16.mxu0 0
    %85 = vmatpush1.bf16.msra.mxu0 0
    %86 = vmatprep.subr.bf16.mxu0 0
    %87 = vmatpush1.bf16.msra.mxu0 0
    %88 = vmatprep.subr.bf16.mxu0 0
    %89 = vmatpush1.bf16.msra.mxu0 0
    %90 = vmatprep.subr.bf16.mxu0 0
    %91 = vmatpush1.bf16.msra.mxu0 %v71
    %92 = vmatprep.subr.bf16.mxu0 0
    %93 = vmatpush1.bf16.msra.mxu0 %v70
    %94 = vmatprep.subr.bf16.mxu0 0
    %95 = vmatpush2.bf16.msra.mxu0 0
    %96 = vmatprep.subr.bf16.mxu0 0
    %97 = vmatpush2.bf16.msra.mxu0 0
    %98 = vmatprep.subr.bf16.mxu0 0
    %99 = vmatpush2.bf16.msra.mxu0 0
    %100 = vmatprep.subr.bf16.mxu0 0
    %101 = vmatpush2.bf16.msra.mxu0 0
    %102 = vmatprep.subr.bf16.mxu0 0
    %103 = vmatpush2.bf16.msra.mxu0 0
    %104 = vmatprep.subr.bf16.mxu0 0
    %105 = vmatpush2.bf16.msra.mxu0 0
    %106 = vmatprep.subr.bf16.mxu0 0
    %107 = vmatpush2.bf16.msra.mxu0 0
    %108 = vmatprep.subr.bf16.mxu0 0
    %109 = vmatpush2.bf16.msra.mxu0 0
    %110 = vmatprep.mubr.bf16.mxu0 0
    %111 = vmatmul.mubr.bf16.gmra.mxu0 %v76
    %v112 = vpop.f32.mrf.mxu0
    %v113 = vadd.f32 %v61, %v112
    %v114 = vpop.f32.mrf.mxu0
    %v115 = vpop.f32.mrf.mxu0
    %v116 = vpop.f32.mrf.mxu0
    %117 = vdwg.mxu0
    %v118 = vpack.c.bf16 %v113, %v113
    %120 = vrot.lane.b32.xlu0 %v118, 96
    %v121 = vpop.permute.xlu0 %120
    %vm122 = vcmask 130048
    %v124 = vsel %vm122, %v118, 0
    %v127 = vsel %vm122, %v121, 0
    %129 = vmatprep.subr.bf16.mxu0 0
    %130 = vmatpush1.bf16.xpose.msra.mxu0 0
    %131 = vmatprep.subr.bf16.mxu0 0
    %132 = vmatpush1.bf16.xpose.msra.mxu0 0
    %133 = vmatprep.subr.bf16.mxu0 0
    %134 = vmatpush1.bf16.xpose.msra.mxu0 0
    %135 = vmatprep.subr.bf16.mxu0 0
    %136 = vmatpush1.bf16.xpose.msra.mxu0 0
    %137 = vmatprep.subr.bf16.mxu0 0
    %138 = vmatpush1.bf16.xpose.msra.mxu0 0
    %139 = vmatprep.subr.bf16.mxu0 0
    %140 = vmatpush1.bf16.xpose.msra.mxu0 0
    %141 = vmatprep.subr.bf16.mxu0 0
    %142 = vmatpush1.bf16.xpose.msra.mxu0 0
    %143 = vmatprep.subr.bf16.mxu0 0
    %144 = vmatpush1.bf16.xpose.msra.mxu0 %v127
    %145 = vmatprep.subr.bf16.mxu0 0
    %146 = vmatpush2.bf16.xpose.msra.mxu0 0
    %147 = vmatprep.subr.bf16.mxu0 0
    %148 = vmatpush2.bf16.xpose.msra.mxu0 0
    %149 = vmatprep.subr.bf16.mxu0 0
    %150 = vmatpush2.bf16.xpose.msra.mxu0 0
    %151 = vmatprep.subr.bf16.mxu0 0
    %152 = vmatpush2.bf16.xpose.msra.mxu0 0
    %153 = vmatprep.subr.bf16.mxu0 0
    %154 = vmatpush2.bf16.xpose.msra.mxu0 0
    %155 = vmatprep.subr.bf16.mxu0 0
    %156 = vmatpush2.bf16.xpose.msra.mxu0 0
    %157 = vmatprep.subr.bf16.mxu0 0
    %158 = vmatpush2.bf16.xpose.msra.mxu0 0
    %159 = vmatprep.subr.bf16.mxu0 0
    %160 = vmatpush2.bf16.xpose.msra.mxu0 0
    %161 = vmatprep.mubr.bf16.mxu0 0
    %162 = vmatmul.mubr.bf16.gmra.mxu0 %v124
    %v163 = vpop.f32.mrf.mxu0
    %v164 = vadd.f32 0.0, %v163
    %v165 = vpop.f32.mrf.mxu0
    %v166 = vpop.f32.mrf.mxu0
    %v167 = vpop.f32.mrf.mxu0
    %168 = vdwg.mxu0
    %v169 = vmul.f32 %v164, 0.25
    %v171 = vlaneseq
    %v172 = vshrl.u32 %v171, 7
    %v173 = vsub.s32 0, %v172
    %v174 = vrot.slane %v35, %v173
    %v176 = vadd.f32 %v169, %v174
    %vm177 = vcmask 64512
    %v178 = vsel %vm177, %v176, -inf
    %179 = vmax.xlane.f32.xlu0 %v178
    %v180 = vpop.xlane.xlu0 %179
    %v181 = vsub.f32 %v176, %v180
    %v182 = vmul.f32 %v181, 1.442695
    %v183 = vpow.pop %v182
    %v184 = vsel %vm177, %v183, 0.0
    %185 = vadd.xlane.f32.xlu0 %v184
    %v186 = vpop.xlane.xlu0 %185
    %v187 = vrcp.pop %v186
    %v188 = vmul.f32 %v183, %v187
    %v189 = vpack.c.bf16 %v188, %v188
    %190 = vrot.lane.b32.xlu0 %v118, 64
    %v191 = vpop.permute.xlu0 %190
    %v193 = vsel %vm177, %v189, 0
    %vm195 = vcmask 1043456
    %v197 = vsel %vm195, %v191, 0
    %199 = vmatprep.subr.bf16.mxu0 0
    %200 = vmatpush1.bf16.msra.mxu0 0
    %201 = vmatprep.subr.bf16.mxu0 0
    %202 = vmatpush1.bf16.msra.mxu0 0
    %203 = vmatprep.subr.bf16.mxu0 0
    %204 = vmatpush1.bf16.msra.mxu0 0
    %205 = vmatprep.subr.bf16.mxu0 0
    %206 = vmatpush1.bf16.msra.mxu0 0
    %207 = vmatprep.subr.bf16.mxu0 0
    %208 = vmatpush1.bf16.msra.mxu0 0
    %209 = vmatprep.subr.bf16.mxu0 0
    %210 = vmatpush1.bf16.msra.mxu0 0
    %211 = vmatprep.subr.bf16.mxu0 0
    %212 = vmatpush1.bf16.msra.mxu0 0
    %213 = vmatprep.subr.bf16.mxu0 0
    %214 = vmatpush1.bf16.msra.mxu0 %v197
    %215 = vmatprep.subr.bf16.mxu0 0
    %216 = vmatpush2.bf16.msra.mxu0 0
    %217 = vmatprep.subr.bf16.mxu0 0
    %218 = vmatpush2.bf16.msra.mxu0 0
    %219 = vmatprep.subr.bf16.mxu0 0
    %220 = vmatpush2.bf16.msra.mxu0 0
    %221 = vmatprep.subr.bf16.mxu0 0
    %222 = vmatpush2.bf16.msra.mxu0 0
    %223 = vmatprep.subr.bf16.mxu0 0
    %224 = vmatpush2.bf16.msra.mxu0 0
    %225 = vmatprep.subr.bf16.mxu0 0
    %226 = vmatpush2.bf16.msra.mxu0 0
    %227 = vmatprep.subr.bf16.mxu0 0
    %228 = vmatpush2.bf16.msra.mxu0 0
    %229 = vmatprep.subr.bf16.mxu0 0
    %230 = vmatpush2.bf16.msra.mxu0 0
    %231 = vmatprep.mubr.bf16.mxu0 0
    %232 = vmatmul.mubr.bf16.gmra.mxu0 %v193
    %v233 = vpop.f32.mrf.mxu0
    %v234 = vadd.f32 0.0, %v233
    %v235 = vpop.f32.mrf.mxu0
    %v236 = vpop.f32.mrf.mxu0
    %v237 = vpop.f32.mrf.mxu0
    %238 = vdwg.mxu0
    %239 = vrot.lane.b32.xlu0 %v118, 112
    %v240 = vpop.permute.xlu0 %239
    %241 = vrot.lane.b32.xlu0 %v118, 80
    %v242 = vpop.permute.xlu0 %241
    %v244 = vsel %vm122, %v240, 0
    %v247 = vsel %vm122, %v242, 0
    %249 = vmatprep.subr.bf16.mxu0 0
    %250 = vmatpush1.bf16.xpose.msra.mxu0 0
    %251 = vmatprep.subr.bf16.mxu0 0
    %252 = vmatpush1.bf16.xpose.msra.mxu0 0
    %253 = vmatprep.subr.bf16.mxu0 0
    %254 = vmatpush1.bf16.xpose.msra.mxu0 0
    %255 = vmatprep.subr.bf16.mxu0 0
    %256 = vmatpush1.bf16.xpose.msra.mxu0 0
    %257 = vmatprep.subr.bf16.mxu0 0
    %258 = vmatpush1.bf16.xpose.msra.mxu0 0
    %259 = vmatprep.subr.bf16.mxu0 0
    %260 = vmatpush1.bf16.xpose.msra.mxu0 0
    %261 = vmatprep.subr.bf16.mxu0 0
    %262 = vmatpush1.bf16.xpose.msra.mxu0 0
    %263 = vmatprep.subr.bf16.mxu0 0
    %264 = vmatpush1.bf16.xpose.msra.mxu0 %v247
    %265 = vmatprep.subr.bf16.mxu0 0
    %266 = vmatpush2.bf16.xpose.msra.mxu0 0
    %267 = vmatprep.subr.bf16.mxu0 0
    %268 = vmatpush2.bf16.xpose.msra.mxu0 0
    %269 = vmatprep.subr.bf16.mxu0 0
    %270 = vmatpush2.bf16.xpose.msra.mxu0 0
    %271 = vmatprep.subr.bf16.mxu0 0
    %272 = vmatpush2.bf16.xpose.msra.mxu0 0
    %273 = vmatprep.subr.bf16.mxu0 0
    %274 = vmatpush2.bf16.xpose.msra.mxu0 0
    %275 = vmatprep.subr.bf16.mxu0 0
    %276 = vmatpush2.bf16.xpose.msra.mxu0 0
    %277 = vmatprep.subr.bf16.mxu0 0
    %278 = vmatpush2.bf16.xpose.msra.mxu0 0
    %279 = vmatprep.subr.bf16.mxu0 0
    %280 = vmatpush2.bf16.xpose.msra.mxu0 0
    %281 = vmatprep.mubr.bf16.mxu0 0
    %282 = vmatmul.mubr.bf16.gmra.mxu0 %v244
    %v283 = vpop.f32.mrf.mxu0
    %v284 = vadd.f32 0.0, %v283
    %v285 = vpop.f32.mrf.mxu0
    %v286 = vpop.f32.mrf.mxu0
    %v287 = vpop.f32.mrf.mxu0
    %288 = vdwg.mxu0
    %v289 = vmul.f32 %v284, 0.25
    %v290 = vadd.f32 %v289, %v174
    %v291 = vsel %vm177, %v290, -inf
    %292 = vmax.xlane.f32.xlu0 %v291
    %v293 = vpop.xlane.xlu0 %292
    %v294 = vsub.f32 %v290, %v293
    %v295 = vmul.f32 %v294, 1.442695
    %v296 = vpow.pop %v295
    %v297 = vsel %vm177, %v296, 0.0
    %298 = vadd.xlane.f32.xlu0 %v297
    %v299 = vpop.xlane.xlu0 %298
    %v300 = vrcp.pop %v299
    %v301 = vmul.f32 %v296, %v300
    %v302 = vpack.c.bf16 %v301, %v301
    %303 = vrot.lane.b32.xlu0 %v118, 48
    %v304 = vpop.permute.xlu0 %303
    %v306 = vsel %vm177, %v302, 0
    %v309 = vsel %vm195, %v304, 0
    %311 = vmatprep.subr.bf16.mxu0 0
    %312 = vmatpush1.bf16.msra.mxu0 0
    %313 = vmatprep.subr.bf16.mxu0 0
    %314 = vmatpush1.bf16.msra.mxu0 0
    %315 = vmatprep.subr.bf16.mxu0 0
    %316 = vmatpush1.bf16.msra.mxu0 0
    %317 = vmatprep.subr.bf16.mxu0 0
    %318 = vmatpush1.bf16.msra.mxu0 0
    %319 = vmatprep.subr.bf16.mxu0 0
    %320 = vmatpush1.bf16.msra.mxu0 0
    %321 = vmatprep.subr.bf16.mxu0 0
    %322 = vmatpush1.bf16.msra.mxu0 0
    %323 = vmatprep.subr.bf16.mxu0 0
    %324 = vmatpush1.bf16.msra.mxu0 0
    %325 = vmatprep.subr.bf16.mxu0 0
    %326 = vmatpush1.bf16.msra.mxu0 %v309
    %327 = vmatprep.subr.bf16.mxu0 0
    %328 = vmatpush2.bf16.msra.mxu0 0
    %329 = vmatprep.subr.bf16.mxu0 0
    %330 = vmatpush2.bf16.msra.mxu0 0
    %331 = vmatprep.subr.bf16.mxu0 0
    %332 = vmatpush2.bf16.msra.mxu0 0
    %333 = vmatprep.subr.bf16.mxu0 0
    %334 = vmatpush2.bf16.msra.mxu0 0
    %335 = vmatprep.subr.bf16.mxu0 0
    %336 = vmatpush2.bf16.msra.mxu0 0
    %337 = vmatprep.subr.bf16.mxu0 0
    %338 = vmatpush2.bf16.msra.mxu0 0
    %339 = vmatprep.subr.bf16.mxu0 0
    %340 = vmatpush2.bf16.msra.mxu0 0
    %341 = vmatprep.subr.bf16.mxu0 0
    %342 = vmatpush2.bf16.msra.mxu0 0
    %343 = vmatprep.mubr.bf16.mxu0 0
    %344 = vmatmul.mubr.bf16.gmra.mxu0 %v306
    %v345 = vpop.f32.mrf.mxu0
    %v346 = vadd.f32 0.0, %v345
    %v347 = vpop.f32.mrf.mxu0
    %v348 = vpop.f32.mrf.mxu0
    %v349 = vpop.f32.mrf.mxu0
    %350 = vdwg.mxu0
    %352 = vrot.lane.b32.xlu0 %v346, 16
    %v353 = vpop.permute.xlu0 %352
    %v355 = vsel %vm122, %v234, %v353
    %v356 = vpack.c.bf16 %v355, %v355
    %v357 = vlaneseq
    %v358 = vshrl.u32 %v357, 7
    %v359 = vsub.s32 1, %v358
    %v360 = vrot.slane %v56, %v359
    %v365 = vunpack.c.l.b16 %v40
    %v366 = vunpack.c.l.b16 %v41
    %v367 = vunpack.c.l.b16 %v42
    %v368 = vunpack.c.l.b16 %v43
    %v369 = vpack.c.b16 %v366, %v365
    %v370 = vpack.c.b16 %v368, %v367
    %v374 = vsel %vm74, %v356, 0
    %376 = vmatprep.subr.bf16.mxu0 0
    %377 = vmatpush1.bf16.msra.mxu0 0
    %378 = vmatprep.subr.bf16.mxu0 0
    %379 = vmatpush1.bf16.msra.mxu0 0
    %380 = vmatprep.subr.bf16.mxu0 0
    %381 = vmatpush1.bf16.msra.mxu0 0
    %382 = vmatprep.subr.bf16.mxu0 0
    %383 = vmatpush1.bf16.msra.mxu0 0
    %384 = vmatprep.subr.bf16.mxu0 0
    %385 = vmatpush1.bf16.msra.mxu0 0
    %386 = vmatprep.subr.bf16.mxu0 0
    %387 = vmatpush1.bf16.msra.mxu0 0
    %388 = vmatprep.subr.bf16.mxu0 0
    %389 = vmatpush1.bf16.msra.mxu0 %v370
    %390 = vmatprep.subr.bf16.mxu0 0
    %391 = vmatpush1.bf16.msra.mxu0 %v369
    %392 = vmatprep.subr.bf16.mxu0 0
    %393 = vmatpush2.bf16.msra.mxu0 0
    %394 = vmatprep.subr.bf16.mxu0 0
    %395 = vmatpush2.bf16.msra.mxu0 0
    %396 = vmatprep.subr.bf16.mxu0 0
    %397 = vmatpush2.bf16.msra.mxu0 0
    %398 = vmatprep.subr.bf16.mxu0 0
    %399 = vmatpush2.bf16.msra.mxu0 0
    %400 = vmatprep.subr.bf16.mxu0 0
    %401 = vmatpush2.bf16.msra.mxu0 0
    %402 = vmatprep.subr.bf16.mxu0 0
    %403 = vmatpush2.bf16.msra.mxu0 0
    %404 = vmatprep.subr.bf16.mxu0 0
    %405 = vmatpush2.bf16.msra.mxu0 0
    %406 = vmatprep.subr.bf16.mxu0 0
    %407 = vmatpush2.bf16.msra.mxu0 0
    %408 = vmatprep.mubr.bf16.mxu0 0
    %409 = vmatmul.mubr.bf16.gmra.mxu0 %v374
    %v410 = vpop.f32.mrf.mxu0
    %v411 = vadd.f32 %v360, %v410
    %v412 = vpop.f32.mrf.mxu0
    %v413 = vpop.f32.mrf.mxu0
    %v414 = vpop.f32.mrf.mxu0
    %415 = vdwg.mxu0
    %v416 = vadd.f32 %v34, %v411
    %v417 = vsel %vm74, %v416, 0.0
    %418 = vadd.xlane.f32.xlu0 %v417
    %v419 = vpop.xlane.xlu0 %418
    %v420 = vrcp.pop 32.0
    %v421 = vmul.f32 %v419, %v420
    %v422 = vsub.f32 %v416, %v421
    %v423 = vmul.f32 %v422, %v422
    %v424 = vsel %vm74, %v423, 0.0
    %425 = vadd.xlane.f32.xlu0 %v424
    %v426 = vpop.xlane.xlu0 %425
    %v427 = vmul.f32 %v426, %v420
    %v428 = vadd.f32 %v427, 1e-05
    %v429 = vrsqrt.pop %v428
    %v430 = vmul.f32 %v422, %v429
    %v431 = vlaneseq
    %v432 = vshrl.u32 %v431, 7
    %v433 = vsub.s32 2, %v432
    %v434 = vrot.slane %v56, %v433
    %v435 = vmul.f32 %v430, %v434
    %v436 = vlaneseq
    %v437 = vshrl.u32 %v436, 7
    %v438 = vsub.s32 3, %v437
    %v439 = vrot.slane %v56, %v438
    %v440 = vadd.f32 %v435, %v439
    %v441 = vpack.c.bf16 %v440, %v440
    %v442 = vlaneseq
    %v443 = vshrl.u32 %v442, 7
    %v444 = vsub.s32 4, %v443
    %v445 = vrot.slane %v56, %v444
    %v450 = vunpack.c.l.b16 %v44
    %v451 = vunpack.c.l.b16 %v45
    %v452 = vunpack.c.l.b16 %v46
    %v453 = vunpack.c.l.b16 %v47
    %v454 = vpack.c.b16 %v451, %v450
    %v455 = vpack.c.b16 %v453, %v452
    %v459 = vsel %vm74, %v441, 0
    %461 = vmatprep.subr.bf16.mxu0 0
    %462 = vmatpush1.bf16.msra.mxu0 0
    %463 = vmatprep.subr.bf16.mxu0 0
    %464 = vmatpush1.bf16.msra.mxu0 0
    %465 = vmatprep.subr.bf16.mxu0 0
    %466 = vmatpush1.bf16.msra.mxu0 0
    %467 = vmatprep.subr.bf16.mxu0 0
    %468 = vmatpush1.bf16.msra.mxu0 0
    %469 = vmatprep.subr.bf16.mxu0 0
    %470 = vmatpush1.bf16.msra.mxu0 0
    %471 = vmatprep.subr.bf16.mxu0 0
    %472 = vmatpush1.bf16.msra.mxu0 0
    %473 = vmatprep.subr.bf16.mxu0 0
    %474 = vmatpush1.bf16.msra.mxu0 %v455
    %475 = vmatprep.subr.bf16.mxu0 0
    %476 = vmatpush1.bf16.msra.mxu0 %v454
    %477 = vmatprep.subr.bf16.mxu0 0
    %478 = vmatpush2.bf16.msra.mxu0 0
    %479 = vmatprep.subr.bf16.mxu0 0
    %480 = vmatpush2.bf16.msra.mxu0 0
    %481 = vmatprep.subr.bf16.mxu0 0
    %482 = vmatpush2.bf16.msra.mxu0 0
    %483 = vmatprep.subr.bf16.mxu0 0
    %484 = vmatpush2.bf16.msra.mxu0 0
    %485 = vmatprep.subr.bf16.mxu0 0
    %486 = vmatpush2.bf16.msra.mxu0 0
    %487 = vmatprep.subr.bf16.mxu0 0
    %488 = vmatpush2.bf16.msra.mxu0 0
    %489 = vmatprep.subr.bf16.mxu0 0
    %490 = vmatpush2.bf16.msra.mxu0 0
    %491 = vmatprep.subr.bf16.mxu0 0
    %492 = vmatpush2.bf16.msra.mxu0 0
    %493 = vmatprep.mubr.bf16.mxu0 0
    %494 = vmatmul.mubr.bf16.gmra.mxu0 %v459
    %v495 = vpop.f32.mrf.mxu0
    %v496 = vadd.f32 %v445, %v495
    %v497 = vpop.f32.mrf.mxu0
    %v498 = vpop.f32.mrf.mxu0
    %v499 = vpop.f32.mrf.mxu0
    %500 = vdwg.mxu0
    %v501 = vmax.f32 %v496, 0.0
    %v502 = vpack.c.bf16 %v501, %v501
    %v503 = vlaneseq
    %v504 = vshrl.u32 %v503, 7
    %v505 = vsub.s32 5, %v504
    %v506 = vrot.slane %v56, %v505
    %v515 = vunpack.c.l.b16 %v48
    %v516 = vunpack.c.l.b16 %v49
    %v517 = vunpack.c.l.b16 %v50
    %v518 = vunpack.c.l.b16 %v51
    %v519 = vunpack.c.l.b16 %v52
    %v520 = vunpack.c.l.b16 %v53
    %v521 = vunpack.c.l.b16 %v54
    %v522 = vunpack.c.l.b16 %v55
    %v523 = vpack.c.b16 %v516, %v515
    %v524 = vpack.c.b16 %v518, %v517
    %v525 = vpack.c.b16 %v520, %v519
    %v526 = vpack.c.b16 %v522, %v521
    %vm531 = vcmask 523264
    %v533 = vsel %vm531, %v502, 0
    %535 = vmatprep.subr.bf16.mxu0 0
    %536 = vmatpush1.bf16.msra.mxu0 0
    %537 = vmatprep.subr.bf16.mxu0 0
    %538 = vmatpush1.bf16.msra.mxu0 0
    %539 = vmatprep.subr.bf16.mxu0 0
    %540 = vmatpush1.bf16.msra.mxu0 0
    %541 = vmatprep.subr.bf16.mxu0 0
    %542 = vmatpush1.bf16.msra.mxu0 0
    %543 = vmatprep.subr.bf16.mxu0 0
    %544 = vmatpush1.bf16.msra.mxu0 %v526
    %545 = vmatprep.subr.bf16.mxu0 0
    %546 = vmatpush1.bf16.msra.mxu0 %v525
    %547 = vmatprep.subr.bf16.mxu0 0
    %548 = vmatpush1.bf16.msra.mxu0 %v524
    %549 = vmatprep.subr.bf16.mxu0 0
    %550 = vmatpush1.bf16.msra.mxu0 %v523
    %551 = vmatprep.subr.bf16.mxu0 0
    %552 = vmatpush2.bf16.msra.mxu0 0
    %553 = vmatprep.subr.bf16.mxu0 0
    %554 = vmatpush2.bf16.msra.mxu0 0
    %555 = vmatprep.subr.bf16.mxu0 0
    %556 = vmatpush2.bf16.msra.mxu0 0
    %557 = vmatprep.subr.bf16.mxu0 0
    %558 = vmatpush2.bf16.msra.mxu0 0
    %559 = vmatprep.subr.bf16.mxu0 0
    %560 = vmatpush2.bf16.msra.mxu0 0
    %561 = vmatprep.subr.bf16.mxu0 0
    %562 = vmatpush2.bf16.msra.mxu0 0
    %563 = vmatprep.subr.bf16.mxu0 0
    %564 = vmatpush2.bf16.msra.mxu0 0
    %565 = vmatprep.subr.bf16.mxu0 0
    %566 = vmatpush2.bf16.msra.mxu0 0
    %567 = vmatprep.mubr.bf16.mxu0 0
    %568 = vmatmul.mubr.bf16.gmra.mxu0 %v533
    %v569 = vpop.f32.mrf.mxu0
    %v570 = vadd.f32 %v506, %v569
    %v571 = vpop.f32.mrf.mxu0
    %v572 = vpop.f32.mrf.mxu0
    %v573 = vpop.f32.mrf.mxu0
    %574 = vdwg.mxu0
    %v575 = vadd.f32 %v440, %v570
    %v576 = vsel %vm74, %v575, 0.0
    %577 = vadd.xlane.f32.xlu0 %v576
    %v578 = vpop.xlane.xlu0 %577
    %v579 = vmul.f32 %v578, %v420
    %v580 = vsub.f32 %v575, %v579
    %v581 = vmul.f32 %v580, %v580
    %v582 = vsel %vm74, %v581, 0.0
    %583 = vadd.xlane.f32.xlu0 %v582
    %v584 = vpop.xlane.xlu0 %583
    %v585 = vmul.f32 %v584, %v420
    %v586 = vadd.f32 %v585, 1e-05
    %v587 = vrsqrt.pop %v586
    %v588 = vmul.f32 %v580, %v587
    %v589 = vlaneseq
    %v590 = vshrl.u32 %v589, 7
    %v591 = vsub.s32 6, %v590
    %v592 = vrot.slane %v56, %v591
    %v593 = vmul.f32 %v588, %v592
    %v594 = vlaneseq
    %v595 = vshrl.u32 %v594, 7
    %v596 = vsub.s32 7, %v595
    %v597 = vrot.slane %v56, %v596
    %v598 = vadd.f32 %v593, %v597
    %s599 = scalar_lea.vmem %s2, 16
    %v600 = vld [vmem:[%s599] sm:$0xf]
    %v601 = vld [vmem:[%s599 + $0x4] sm:$0xf]
    %v602 = vld [vmem:[%s599 + $0x8] sm:$0xf]
    %v603 = vld [vmem:[%s599 + $0xc] sm:$0xf]
    %s604 = scalar_lea.vmem %s3, 16
    %v605 = vld [vmem:[%s604] sm:$0xf]
    %v606 = vld [vmem:[%s604 + $0x4] sm:$0xf]
    %v607 = vld [vmem:[%s604 + $0x8] sm:$0xf]
    %v608 = vld [vmem:[%s604 + $0xc] sm:$0xf]
    %s609 = scalar_lea.vmem %s4, 16
    %v610 = vld [vmem:[%s609] sm:$0xf]
    %v611 = vld [vmem:[%s609 + $0x4] sm:$0xf]
    %v612 = vld [vmem:[%s609 + $0x8] sm:$0xf]
    %v613 = vld [vmem:[%s609 + $0xc] sm:$0xf]
    %s614 = scalar_lea.vmem %s5, 32
    %v615 = vld [vmem:[%s614] sm:$0xf]
    %v616 = vld [vmem:[%s614 + $0x4] sm:$0xf]
    %v617 = vld [vmem:[%s614 + $0x8] sm:$0xf]
    %v618 = vld [vmem:[%s614 + $0xc] sm:$0xf]
    %v619 = vld [vmem:[%s614 + $0x10] sm:$0xf]
    %v620 = vld [vmem:[%s614 + $0x14] sm:$0xf]
    %v621 = vld [vmem:[%s614 + $0x18] sm:$0xf]
    %v622 = vld [vmem:[%s614 + $0x1c] sm:$0xf]
    %s623 = scalar_lea.vmem %s6, 8
    %v624 = vld [vmem:[%s623] sm:$0xff]
    %v625 = vpack.c.bf16 %v598, %v598
    %v626 = vlaneseq
    %v627 = vshrl.u32 %v626, 7
    %v628 = vsub.s32 0, %v627
    %v629 = vrot.slane %v624, %v628
    %v634 = vunpack.c.l.b16 %v600
    %v635 = vunpack.c.l.b16 %v601
    %v636 = vunpack.c.l.b16 %v602
    %v637 = vunpack.c.l.b16 %v603
    %v638 = vpack.c.b16 %v635, %v634
    %v639 = vpack.c.b16 %v637, %v636
    %v643 = vsel %vm74, %v625, 0
    %645 = vmatprep.subr.bf16.mxu0 0
    %646 = vmatpush1.bf16.msra.mxu0 0
    %647 = vmatprep.subr.bf16.mxu0 0
    %648 = vmatpush1.bf16.msra.mxu0 0
    %649 = vmatprep.subr.bf16.mxu0 0
    %650 = vmatpush1.bf16.msra.mxu0 0
    %651 = vmatprep.subr.bf16.mxu0 0
    %652 = vmatpush1.bf16.msra.mxu0 0
    %653 = vmatprep.subr.bf16.mxu0 0
    %654 = vmatpush1.bf16.msra.mxu0 0
    %655 = vmatprep.subr.bf16.mxu0 0
    %656 = vmatpush1.bf16.msra.mxu0 0
    %657 = vmatprep.subr.bf16.mxu0 0
    %658 = vmatpush1.bf16.msra.mxu0 %v639
    %659 = vmatprep.subr.bf16.mxu0 0
    %660 = vmatpush1.bf16.msra.mxu0 %v638
    %661 = vmatprep.subr.bf16.mxu0 0
    %662 = vmatpush2.bf16.msra.mxu0 0
    %663 = vmatprep.subr.bf16.mxu0 0
    %664 = vmatpush2.bf16.msra.mxu0 0
    %665 = vmatprep.subr.bf16.mxu0 0
    %666 = vmatpush2.bf16.msra.mxu0 0
    %667 = vmatprep.subr.bf16.mxu0 0
    %668 = vmatpush2.bf16.msra.mxu0 0
    %669 = vmatprep.subr.bf16.mxu0 0
    %670 = vmatpush2.bf16.msra.mxu0 0
    %671 = vmatprep.subr.bf16.mxu0 0
    %672 = vmatpush2.bf16.msra.mxu0 0
    %673 = vmatprep.subr.bf16.mxu0 0
    %674 = vmatpush2.bf16.msra.mxu0 0
    %675 = vmatprep.subr.bf16.mxu0 0
    %676 = vmatpush2.bf16.msra.mxu0 0
    %677 = vmatprep.mubr.bf16.mxu0 0
    %678 = vmatmul.mubr.bf16.gmra.mxu0 %v643
    %v679 = vpop.f32.mrf.mxu0
    %v680 = vadd.f32 %v629, %v679
    %v681 = vpop.f32.mrf.mxu0
    %v682 = vpop.f32.mrf.mxu0
    %v683 = vpop.f32.mrf.mxu0
    %684 = vdwg.mxu0
    %v685 = vpack.c.bf16 %v680, %v680
    %687 = vrot.lane.b32.xlu0 %v685, 96
    %v688 = vpop.permute.xlu0 %687
    %v690 = vsel %vm122, %v685, 0
    %v693 = vsel %vm122, %v688, 0
    %695 = vmatprep.subr.bf16.mxu0 0
    %696 = vmatpush1.bf16.xpose.msra.mxu0 0
    %697 = vmatprep.subr.bf16.mxu0 0
    %698 = vmatpush1.bf16.xpose.msra.mxu0 0
    %699 = vmatprep.subr.bf16.mxu0 0
    %700 = vmatpush1.bf16.xpose.msra.mxu0 0
    %701 = vmatprep.subr.bf16.mxu0 0
    %702 = vmatpush1.bf16.xpose.msra.mxu0 0
    %703 = vmatprep.subr.bf16.mxu0 0
    %704 = vmatpush1.bf16.xpose.msra.mxu0 0
    %705 = vmatprep.subr.bf16.mxu0 0
    %706 = vmatpush1.bf16.xpose.msra.mxu0 0
    %707 = vmatprep.subr.bf16.mxu0 0
    %708 = vmatpush1.bf16.xpose.msra.mxu0 0
    %709 = vmatprep.subr.bf16.mxu0 0
    %710 = vmatpush1.bf16.xpose.msra.mxu0 %v693
    %711 = vmatprep.subr.bf16.mxu0 0
    %712 = vmatpush2.bf16.xpose.msra.mxu0 0
    %713 = vmatprep.subr.bf16.mxu0 0
    %714 = vmatpush2.bf16.xpose.msra.mxu0 0
    %715 = vmatprep.subr.bf16.mxu0 0
    %716 = vmatpush2.bf16.xpose.msra.mxu0 0
    %717 = vmatprep.subr.bf16.mxu0 0
    %718 = vmatpush2.bf16.xpose.msra.mxu0 0
    %719 = vmatprep.subr.bf16.mxu0 0
    %720 = vmatpush2.bf16.xpose.msra.mxu0 0
    %721 = vmatprep.subr.bf16.mxu0 0
    %722 = vmatpush2.bf16.xpose.msra.mxu0 0
    %723 = vmatprep.subr.bf16.mxu0 0
    %724 = vmatpush2.bf16.xpose.msra.mxu0 0
    %725 = vmatprep.subr.bf16.mxu0 0
    %726 = vmatpush2.bf16.xpose.msra.mxu0 0
    %727 = vmatprep.mubr.bf16.mxu0 0
    %728 = vmatmul.mubr.bf16.gmra.mxu0 %v690
    %v729 = vpop.f32.mrf.mxu0
    %v730 = vadd.f32 0.0, %v729
    %v731 = vpop.f32.mrf.mxu0
    %v732 = vpop.f32.mrf.mxu0
    %v733 = vpop.f32.mrf.mxu0
    %734 = vdwg.mxu0
    %v735 = vmul.f32 %v730, 0.25
    %v736 = vadd.f32 %v735, %v174
    %v737 = vsel %vm177, %v736, -inf
    %738 = vmax.xlane.f32.xlu0 %v737
    %v739 = vpop.xlane.xlu0 %738
    %v740 = vsub.f32 %v736, %v739
    %v741 = vmul.f32 %v740, 1.442695
    %v742 = vpow.pop %v741
    %v743 = vsel %vm177, %v742, 0.0
    %744 = vadd.xlane.f32.xlu0 %v743
    %v745 = vpop.xlane.xlu0 %744
    %v746 = vrcp.pop %v745
    %v747 = vmul.f32 %v742, %v746
    %v748 = vpack.c.bf16 %v747, %v747
    %749 = vrot.lane.b32.xlu0 %v685, 64
    %v750 = vpop.permute.xlu0 %749
    %v752 = vsel %vm177, %v748, 0
    %v755 = vsel %vm195, %v750, 0
    %757 = vmatprep.subr.bf16.mxu0 0
    %758 = vmatpush1.bf16.msra.mxu0 0
    %759 = vmatprep.subr.bf16.mxu0 0
    %760 = vmatpush1.bf16.msra.mxu0 0
    %761 = vmatprep.subr.bf16.mxu0 0
    %762 = vmatpush1.bf16.msra.mxu0 0
    %763 = vmatprep.subr.bf16.mxu0 0
    %764 = vmatpush1.bf16.msra.mxu0 0
    %765 = vmatprep.subr.bf16.mxu0 0
    %766 = vmatpush1.bf16.msra.mxu0 0
    %767 = vmatprep.subr.bf16.mxu0 0
    %768 = vmatpush1.bf16.msra.mxu0 0
    %769 = vmatprep.subr.bf16.mxu0 0
    %770 = vmatpush1.bf16.msra.mxu0 0
    %771 = vmatprep.subr.bf16.mxu0 0
    %772 = vmatpush1.bf16.msra.mxu0 %v755
    %773 = vmatprep.subr.bf16.mxu0 0
    %774 = vmatpush2.bf16.msra.mxu0 0
    %775 = vmatprep.subr.bf16.mxu0 0
    %776 = vmatpush2.bf16.msra.mxu0 0
    %777 = vmatprep.subr.bf16.mxu0 0
    %778 = vmatpush2.bf16.msra.mxu0 0
    %779 = vmatprep.subr.bf16.mxu0 0
    %780 = vmatpush2.bf16.msra.mxu0 0
    %781 = vmatprep.subr.bf16.mxu0 0
    %782 = vmatpush2.bf16.msra.mxu0 0
    %783 = vmatprep.subr.bf16.mxu0 0
    %784 = vmatpush2.bf16.msra.mxu0 0
    %785 = vmatprep.subr.bf16.mxu0 0
    %786 = vmatpush2.bf16.msra.mxu0 0
    %787 = vmatprep.subr.bf16.mxu0 0
    %788 = vmatpush2.bf16.msra.mxu0 0
    %789 = vmatprep.mubr.bf16.mxu0 0
    %790 = vmatmul.mubr.bf16.gmra.mxu0 %v752
    %v791 = vpop.f32.mrf.mxu0
    %v792 = vadd.f32 0.0, %v791
    %v793 = vpop.f32.mrf.mxu0
    %v794 = vpop.f32.mrf.mxu0
    %v795 = vpop.f32.mrf.mxu0
    %796 = vdwg.mxu0
    %797 = vrot.lane.b32.xlu0 %v685, 112
    %v798 = vpop.permute.xlu0 %797
    %799 = vrot.lane.b32.xlu0 %v685, 80
    %v800 = vpop.permute.xlu0 %799
    %v802 = vsel %vm122, %v798, 0
    %v805 = vsel %vm122, %v800, 0
    %807 = vmatprep.subr.bf16.mxu0 0
    %808 = vmatpush1.bf16.xpose.msra.mxu0 0
    %809 = vmatprep.subr.bf16.mxu0 0
    %810 = vmatpush1.bf16.xpose.msra.mxu0 0
    %811 = vmatprep.subr.bf16.mxu0 0
    %812 = vmatpush1.bf16.xpose.msra.mxu0 0
    %813 = vmatprep.subr.bf16.mxu0 0
    %814 = vmatpush1.bf16.xpose.msra.mxu0 0
    %815 = vmatprep.subr.bf16.mxu0 0
    %816 = vmatpush1.bf16.xpose.msra.mxu0 0
    %817 = vmatprep.subr.bf16.mxu0 0
    %818 = vmatpush1.bf16.xpose.msra.mxu0 0
    %819 = vmatprep.subr.bf16.mxu0 0
    %820 = vmatpush1.bf16.xpose.msra.mxu0 0
    %821 = vmatprep.subr.bf16.mxu0 0
    %822 = vmatpush1.bf16.xpose.msra.mxu0 %v805
    %823 = vmatprep.subr.bf16.mxu0 0
    %824 = vmatpush2.bf16.xpose.msra.mxu0 0
    %825 = vmatprep.subr.bf16.mxu0 0
    %826 = vmatpush2.bf16.xpose.msra.mxu0 0
    %827 = vmatprep.subr.bf16.mxu0 0
    %828 = vmatpush2.bf16.xpose.msra.mxu0 0
    %829 = vmatprep.subr.bf16.mxu0 0
    %830 = vmatpush2.bf16.xpose.msra.mxu0 0
    %831 = vmatprep.subr.bf16.mxu0 0
    %832 = vmatpush2.bf16.xpose.msra.mxu0 0
    %833 = vmatprep.subr.bf16.mxu0 0
    %834 = vmatpush2.bf16.xpose.msra.mxu0 0
    %835 = vmatprep.subr.bf16.mxu0 0
    %836 = vmatpush2.bf16.xpose.msra.mxu0 0
    %837 = vmatprep.subr.bf16.mxu0 0
    %838 = vmatpush2.bf16.xpose.msra.mxu0 0
    %839 = vmatprep.mubr.bf16.mxu0 0
    %840 = vmatmul.mubr.bf16.gmra.mxu0 %v802
    %v841 = vpop.f32.mrf.mxu0
    %v842 = vadd.f32 0.0, %v841
    %v843 = vpop.f32.mrf.mxu0
    %v844 = vpop.f32.mrf.mxu0
    %v845 = vpop.f32.mrf.mxu0
    %846 = vdwg.mxu0
    %v847 = vmul.f32 %v842, 0.25
    %v848 = vadd.f32 %v847, %v174
    %v849 = vsel %vm177, %v848, -inf
    %850 = vmax.xlane.f32.xlu0 %v849
    %v851 = vpop.xlane.xlu0 %850
    %v852 = vsub.f32 %v848, %v851
    %v853 = vmul.f32 %v852, 1.442695
    %v854 = vpow.pop %v853
    %v855 = vsel %vm177, %v854, 0.0
    %856 = vadd.xlane.f32.xlu0 %v855
    %v857 = vpop.xlane.xlu0 %856
    %v858 = vrcp.pop %v857
    %v859 = vmul.f32 %v854, %v858
    %v860 = vpack.c.bf16 %v859, %v859
    %861 = vrot.lane.b32.xlu0 %v685, 48
    %v862 = vpop.permute.xlu0 %861
    %v864 = vsel %vm177, %v860, 0
    %v867 = vsel %vm195, %v862, 0
    %869 = vmatprep.subr.bf16.mxu0 0
    %870 = vmatpush1.bf16.msra.mxu0 0
    %871 = vmatprep.subr.bf16.mxu0 0
    %872 = vmatpush1.bf16.msra.mxu0 0
    %873 = vmatprep.subr.bf16.mxu0 0
    %874 = vmatpush1.bf16.msra.mxu0 0
    %875 = vmatprep.subr.bf16.mxu0 0
    %876 = vmatpush1.bf16.msra.mxu0 0
    %877 = vmatprep.subr.bf16.mxu0 0
    %878 = vmatpush1.bf16.msra.mxu0 0
    %879 = vmatprep.subr.bf16.mxu0 0
    %880 = vmatpush1.bf16.msra.mxu0 0
    %881 = vmatprep.subr.bf16.mxu0 0
    %882 = vmatpush1.bf16.msra.mxu0 0
    %883 = vmatprep.subr.bf16.mxu0 0
    %884 = vmatpush1.bf16.msra.mxu0 %v867
    %885 = vmatprep.subr.bf16.mxu0 0
    %886 = vmatpush2.bf16.msra.mxu0 0
    %887 = vmatprep.subr.bf16.mxu0 0
    %888 = vmatpush2.bf16.msra.mxu0 0
    %889 = vmatprep.subr.bf16.mxu0 0
    %890 = vmatpush2.bf16.msra.mxu0 0
    %891 = vmatprep.subr.bf16.mxu0 0
    %892 = vmatpush2.bf16.msra.mxu0 0
    %893 = vmatprep.subr.bf16.mxu0 0
    %894 = vmatpush2.bf16.msra.mxu0 0
    %895 = vmatprep.subr.bf16.mxu0 0
    %896 = vmatpush2.bf16.msra.mxu0 0
    %897 = vmatprep.subr.bf16.mxu0 0
    %898 = vmatpush2.bf16.msra.mxu0 0
    %899 = vmatprep.subr.bf16.mxu0 0
    %900 = vmatpush2.bf16.msra.mxu0 0
    %901 = vmatprep.mubr.bf16.mxu0 0
    %902 = vmatmul.mubr.bf16.gmra.mxu0 %v864
    %v903 = vpop.f32.mrf.mxu0
    %v904 = vadd.f32 0.0, %v903
    %v905 = vpop.f32.mrf.mxu0
    %v906 = vpop.f32.mrf.mxu0
    %v907 = vpop.f32.mrf.mxu0
    %908 = vdwg.mxu0
    %910 = vrot.lane.b32.xlu0 %v904, 16
    %v911 = vpop.permute.xlu0 %910
    %v913 = vsel %vm122, %v792, %v911
    %v914 = vpack.c.bf16 %v913, %v913
    %v915 = vlaneseq
    %v916 = vshrl.u32 %v915, 7
    %v917 = vsub.s32 1, %v916
    %v918 = vrot.slane %v624, %v917
    %v923 = vunpack.c.l.b16 %v605
    %v924 = vunpack.c.l.b16 %v606
    %v925 = vunpack.c.l.b16 %v607
    %v926 = vunpack.c.l.b16 %v608
    %v927 = vpack.c.b16 %v924, %v923
    %v928 = vpack.c.b16 %v926, %v925
    %v932 = vsel %vm74, %v914, 0
    %934 = vmatprep.subr.bf16.mxu0 0
    %935 = vmatpush1.bf16.msra.mxu0 0
    %936 = vmatprep.subr.bf16.mxu0 0
    %937 = vmatpush1.bf16.msra.mxu0 0
    %938 = vmatprep.subr.bf16.mxu0 0
    %939 = vmatpush1.bf16.msra.mxu0 0
    %940 = vmatprep.subr.bf16.mxu0 0
    %941 = vmatpush1.bf16.msra.mxu0 0
    %942 = vmatprep.subr.bf16.mxu0 0
    %943 = vmatpush1.bf16.msra.mxu0 0
    %944 = vmatprep.subr.bf16.mxu0 0
    %945 = vmatpush1.bf16.msra.mxu0 0
    %946 = vmatprep.subr.bf16.mxu0 0
    %947 = vmatpush1.bf16.msra.mxu0 %v928
    %948 = vmatprep.subr.bf16.mxu0 0
    %949 = vmatpush1.bf16.msra.mxu0 %v927
    %950 = vmatprep.subr.bf16.mxu0 0
    %951 = vmatpush2.bf16.msra.mxu0 0
    %952 = vmatprep.subr.bf16.mxu0 0
    %953 = vmatpush2.bf16.msra.mxu0 0
    %954 = vmatprep.subr.bf16.mxu0 0
    %955 = vmatpush2.bf16.msra.mxu0 0
    %956 = vmatprep.subr.bf16.mxu0 0
    %957 = vmatpush2.bf16.msra.mxu0 0
    %958 = vmatprep.subr.bf16.mxu0 0
    %959 = vmatpush2.bf16.msra.mxu0 0
    %960 = vmatprep.subr.bf16.mxu0 0
    %961 = vmatpush2.bf16.msra.mxu0 0
    %962 = vmatprep.subr.bf16.mxu0 0
    %963 = vmatpush2.bf16.msra.mxu0 0
    %964 = vmatprep.subr.bf16.mxu0 0
    %965 = vmatpush2.bf16.msra.mxu0 0
    %966 = vmatprep.mubr.bf16.mxu0 0
    %967 = vmatmul.mubr.bf16.gmra.mxu0 %v932
    %v968 = vpop.f32.mrf.mxu0
    %v969 = vadd.f32 %v918, %v968
    %v970 = vpop.f32.mrf.mxu0
    %v971 = vpop.f32.mrf.mxu0
    %v972 = vpop.f32.mrf.mxu0
    %973 = vdwg.mxu0
    %v974 = vadd.f32 %v598, %v969
    %v975 = vsel %vm74, %v974, 0.0
    %976 = vadd.xlane.f32.xlu0 %v975
    %v977 = vpop.xlane.xlu0 %976
    %v978 = vmul.f32 %v977, %v420
    %v979 = vsub.f32 %v974, %v978
    %v980 = vmul.f32 %v979, %v979
    %v981 = vsel %vm74, %v980, 0.0
    %982 = vadd.xlane.f32.xlu0 %v981
    %v983 = vpop.xlane.xlu0 %982
    %v984 = vmul.f32 %v983, %v420
    %v985 = vadd.f32 %v984, 1e-05
    %v986 = vrsqrt.pop %v985
    %v987 = vmul.f32 %v979, %v986
    %v988 = vlaneseq
    %v989 = vshrl.u32 %v988, 7
    %v990 = vsub.s32 2, %v989
    %v991 = vrot.slane %v624, %v990
    %v992 = vmul.f32 %v987, %v991
    %v993 = vlaneseq
    %v994 = vshrl.u32 %v993, 7
    %v995 = vsub.s32 3, %v994
    %v996 = vrot.slane %v624, %v995
    %v997 = vadd.f32 %v992, %v996
    %v998 = vpack.c.bf16 %v997, %v997
    %v999 = vlaneseq
    %v1000 = vshrl.u32 %v999, 7
    %v1001 = vsub.s32 4, %v1000
    %v1002 = vrot.slane %v624, %v1001
    %v1007 = vunpack.c.l.b16 %v610
    %v1008 = vunpack.c.l.b16 %v611
    %v1009 = vunpack.c.l.b16 %v612
    %v1010 = vunpack.c.l.b16 %v613
    %v1011 = vpack.c.b16 %v1008, %v1007
    %v1012 = vpack.c.b16 %v1010, %v1009
    %v1016 = vsel %vm74, %v998, 0
    %1018 = vmatprep.subr.bf16.mxu0 0
    %1019 = vmatpush1.bf16.msra.mxu0 0
    %1020 = vmatprep.subr.bf16.mxu0 0
    %1021 = vmatpush1.bf16.msra.mxu0 0
    %1022 = vmatprep.subr.bf16.mxu0 0
    %1023 = vmatpush1.bf16.msra.mxu0 0
    %1024 = vmatprep.subr.bf16.mxu0 0
    %1025 = vmatpush1.bf16.msra.mxu0 0
    %1026 = vmatprep.subr.bf16.mxu0 0
    %1027 = vmatpush1.bf16.msra.mxu0 0
    %1028 = vmatprep.subr.bf16.mxu0 0
    %1029 = vmatpush1.bf16.msra.mxu0 0
    %1030 = vmatprep.subr.bf16.mxu0 0
    %1031 = vmatpush1.bf16.msra.mxu0 %v1012
    %1032 = vmatprep.subr.bf16.mxu0 0
    %1033 = vmatpush1.bf16.msra.mxu0 %v1011
    %1034 = vmatprep.subr.bf16.mxu0 0
    %1035 = vmatpush2.bf16.msra.mxu0 0
    %1036 = vmatprep.subr.bf16.mxu0 0
    %1037 = vmatpush2.bf16.msra.mxu0 0
    %1038 = vmatprep.subr.bf16.mxu0 0
    %1039 = vmatpush2.bf16.msra.mxu0 0
    %1040 = vmatprep.subr.bf16.mxu0 0
    %1041 = vmatpush2.bf16.msra.mxu0 0
    %1042 = vmatprep.subr.bf16.mxu0 0
    %1043 = vmatpush2.bf16.msra.mxu0 0
    %1044 = vmatprep.subr.bf16.mxu0 0
    %1045 = vmatpush2.bf16.msra.mxu0 0
    %1046 = vmatprep.subr.bf16.mxu0 0
    %1047 = vmatpush2.bf16.msra.mxu0 0
    %1048 = vmatprep.subr.bf16.mxu0 0
    %1049 = vmatpush2.bf16.msra.mxu0 0
    %1050 = vmatprep.mubr.bf16.mxu0 0
    %1051 = vmatmul.mubr.bf16.gmra.mxu0 %v1016
    %v1052 = vpop.f32.mrf.mxu0
    %v1053 = vadd.f32 %v1002, %v1052
    %v1054 = vpop.f32.mrf.mxu0
    %v1055 = vpop.f32.mrf.mxu0
    %v1056 = vpop.f32.mrf.mxu0
    %1057 = vdwg.mxu0
    %v1058 = vmax.f32 %v1053, 0.0
    %v1059 = vpack.c.bf16 %v1058, %v1058
    %v1060 = vlaneseq
    %v1061 = vshrl.u32 %v1060, 7
    %v1062 = vsub.s32 5, %v1061
    %v1063 = vrot.slane %v624, %v1062
    %v1072 = vunpack.c.l.b16 %v615
    %v1073 = vunpack.c.l.b16 %v616
    %v1074 = vunpack.c.l.b16 %v617
    %v1075 = vunpack.c.l.b16 %v618
    %v1076 = vunpack.c.l.b16 %v619
    %v1077 = vunpack.c.l.b16 %v620
    %v1078 = vunpack.c.l.b16 %v621
    %v1079 = vunpack.c.l.b16 %v622
    %v1080 = vpack.c.b16 %v1073, %v1072
    %v1081 = vpack.c.b16 %v1075, %v1074
    %v1082 = vpack.c.b16 %v1077, %v1076
    %v1083 = vpack.c.b16 %v1079, %v1078
    %v1089 = vsel %vm531, %v1059, 0
    %1091 = vmatprep.subr.bf16.mxu0 0
    %1092 = vmatpush1.bf16.msra.mxu0 0
    %1093 = vmatprep.subr.bf16.mxu0 0
    %1094 = vmatpush1.bf16.msra.mxu0 0
    %1095 = vmatprep.subr.bf16.mxu0 0
    %1096 = vmatpush1.bf16.msra.mxu0 0
    %1097 = vmatprep.subr.bf16.mxu0 0
    %1098 = vmatpush1.bf16.msra.mxu0 0
    %1099 = vmatprep.subr.bf16.mxu0 0
    %1100 = vmatpush1.bf16.msra.mxu0 %v1083
    %1101 = vmatprep.subr.bf16.mxu0 0
    %1102 = vmatpush1.bf16.msra.mxu0 %v1082
    %1103 = vmatprep.subr.bf16.mxu0 0
    %1104 = vmatpush1.bf16.msra.mxu0 %v1081
    %1105 = vmatprep.subr.bf16.mxu0 0
    %1106 = vmatpush1.bf16.msra.mxu0 %v1080
    %1107 = vmatprep.subr.bf16.mxu0 0
    %1108 = vmatpush2.bf16.msra.mxu0 0
    %1109 = vmatprep.subr.bf16.mxu0 0
    %1110 = vmatpush2.bf16.msra.mxu0 0
    %1111 = vmatprep.subr.bf16.mxu0 0
    %1112 = vmatpush2.bf16.msra.mxu0 0
    %1113 = vmatprep.subr.bf16.mxu0 0
    %1114 = vmatpush2.bf16.msra.mxu0 0
    %1115 = vmatprep.subr.bf16.mxu0 0
    %1116 = vmatpush2.bf16.msra.mxu0 0
    %1117 = vmatprep.subr.bf16.mxu0 0
    %1118 = vmatpush2.bf16.msra.mxu0 0
    %1119 = vmatprep.subr.bf16.mxu0 0
    %1120 = vmatpush2.bf16.msra.mxu0 0
    %1121 = vmatprep.subr.bf16.mxu0 0
    %1122 = vmatpush2.bf16.msra.mxu0 0
    %1123 = vmatprep.mubr.bf16.mxu0 0
    %1124 = vmatmul.mubr.bf16.gmra.mxu0 %v1089
    %v1125 = vpop.f32.mrf.mxu0
    %v1126 = vadd.f32 %v1063, %v1125
    %v1127 = vpop.f32.mrf.mxu0
    %v1128 = vpop.f32.mrf.mxu0
    %v1129 = vpop.f32.mrf.mxu0
    %1130 = vdwg.mxu0
    %v1131 = vadd.f32 %v997, %v1126
    %v1132 = vsel %vm74, %v1131, 0.0
    %1133 = vadd.xlane.f32.xlu0 %v1132
    %v1134 = vpop.xlane.xlu0 %1133
    %v1135 = vmul.f32 %v1134, %v420
    %v1136 = vsub.f32 %v1131, %v1135
    %v1137 = vmul.f32 %v1136, %v1136
    %v1138 = vsel %vm74, %v1137, 0.0
    %1139 = vadd.xlane.f32.xlu0 %v1138
    %v1140 = vpop.xlane.xlu0 %1139
    %v1141 = vmul.f32 %v1140, %v420
    %v1142 = vadd.f32 %v1141, 1e-05
    %v1143 = vrsqrt.pop %v1142
    %v1144 = vmul.f32 %v1136, %v1143
    %v1145 = vlaneseq
    %v1146 = vshrl.u32 %v1145, 7
    %v1147 = vsub.s32 6, %v1146
    %v1148 = vrot.slane %v624, %v1147
    %v1149 = vmul.f32 %v1144, %v1148
    %v1150 = vlaneseq
    %v1151 = vshrl.u32 %v1150, 7
    %v1152 = vsub.s32 7, %v1151
    %v1153 = vrot.slane %v624, %v1152
    %v1154 = vadd.f32 %v1149, %v1153
    %1155 = vst.msk [vmem:[#allocation2] sm:$0xff] %vm74, %v1154
    %v1156 = vsel %vm74, %v1154, 0.0
    %v1157 = vrot.slane %v1156, 4
    %v1158 = vadd.f32 %v1156, %v1157
    %v1159 = vrot.slane %v1158, 2
    %v1160 = vadd.f32 %v1158, %v1159
    %v1161 = vrot.slane %v1160, 1
    %v1162 = vadd.f32 %v1160, %v1161
    %v1163 = vmul.f32 %v1162, 0.125
    %v1164 = vld [vmem:[%s7] sm:$0x1]
    %v1165 = vld [vmem:[%s7 + $0x1] sm:$0x1]
    %v1166 = vmul.f32 %v1163, %v1164
    %vm1167 = vcmask 253952
    %v1168 = vsel %vm1167, %v1166, 0.0
    %1169 = vadd.xlane.f32.xlu0 %v1168
    %v1170 = vpop.xlane.xlu0 %1169
    %v1171 = vadd.f32 %v1170, %v1165
    %vm1172 = vcmask 0
    %1173 = vst.msk [vmem:[#allocation4] sm:$0x1] %vm1172, %v1171
    // Predicated region
    $region34: #{_encode_text_impl.1} parent=1 // pred_check
      _
    $region35: #{_encode_text_impl.1} parent=1 // pred_check_branch
      %1175 = sbr.rel (0) target = $region37
    $region36: #{_encode_text_impl.1} parent=1 // pred_region
      %s1177 = ssub.s32 128, 128
      %1178 = vsyncadd [#allocation3], %s1177
      %s1180 = sshll.u32 [#allocation2], 4
      %s1181 = int_to_ptr.vmem [resolvable:$true] %s1180
      %1183 = dma.vmem_to_hbm [thread:$0]  %s1181, 128, %s8, [#allocation3]
    $region37: #{_encode_text_impl.1} parent=1 // pred_fallthru
      _
    // Predicated region
    $region38: #{_encode_text_impl.1} parent=1 // pred_check
      _
    $region39: #{_encode_text_impl.1} parent=1 // pred_check_branch
      %1185 = sbr.rel (0) target = $region41
    $region40: #{_encode_text_impl.1} parent=1 // pred_region
      %s1187 = ssub.s32 16, 16
      %1188 = vsyncadd [#allocation5], %s1187
      %s1190 = sshll.u32 [#allocation4], 4
      %s1191 = int_to_ptr.vmem [resolvable:$true] %s1190
      %1193 = dma.vmem_to_hbm [thread:$0]  %s1191, 16, %s9, [#allocation5]
    $region41: #{_encode_text_impl.1} parent=1 // pred_fallthru
      _
    // Predicated region
    $region42: #{_encode_text_impl.1} parent=1 // pred_check
      _
    $region43: #{_encode_text_impl.1} parent=1 // pred_check_branch
      %1195 = sbr.rel (0) target = $region45
    $region44: #{_encode_text_impl.1} parent=1 // pred_region
      %1196 = dma.done [#allocation3], 128
    $region45: #{_encode_text_impl.1} parent=1 // pred_fallthru
      _
    // Predicated region
    $region46: #{_encode_text_impl.1} parent=1 // pred_check
      _
    $region47: #{_encode_text_impl.1} parent=1 // pred_check_branch
      %1198 = sbr.rel (0) target = $region49
    $region48: #{_encode_text_impl.1} parent=1 // pred_region
      %1199 = dma.done [#allocation5], 16
    $region49: #{_encode_text_impl.1} parent=1 // pred_fallthru
      _
    %1200 = vsyncpa [#allocation3], 1
    %1201 = vsyncpa [#allocation5], 1

</llo_original>
